<compile_context>
chip_gen: v5e
topology: v5e:2x2
jax: 0.10.0
libtpu: 0.0.40
codegen_flags: <defaults>
</compile_context>

<pallas_src>
import functools

import jax
import jax.numpy as jnp
import numpy as np
from jax import lax
from jax.experimental import pallas as pl
from jax.experimental.pallas import tpu as pltpu


def _round_up(x, m):
    return ((x + m - 1) // m) * m


# ----------------------------------------------------------------------------
# Kernel 1: fused BN -> ReLU -> dilated 3x3 conv for the three caspp branches.
# One grid step = one batch element; the three branch results are written
# directly into the channel-concatenated (1, 3*C, H*W) output block.
# ----------------------------------------------------------------------------
def _fused_branches_kernel(x_ref, sc_ref, sh_ref, w_ref, b_ref, o_ref,
                           pad_ref, *, C, H, W, PM, dils, K):
    Wp = W + 2 * PM            # padded width of the shared geometry
    HWp = H * Wp               # "dense" (padded-width) flattened output length

    # Zero the flat padded scratch.  This is only C*FLAT f32 (a few vregs) per
    # step; the activation interior is overwritten below for every branch so
    # only the border zeros matter, but re-zeroing each step keeps the kernel
    # correct when the parallel batch axis is sharded across TensorCores.
    pad_ref[...] = jnp.zeros_like(pad_ref)

    x = x_ref[0]               # (C, H*W), fully lane-dense

    for b, d in enumerate(dils):
        # BatchNorm folded to a per-channel affine, then ReLU (f32 VPU math).
        act = jnp.maximum(x * sc_ref[b] + sh_ref[b], 0.0)          # (C, H*W)

        # Scatter activation rows into the flattened zero-padded buffer.
        # Conceptual 2D layout is (Hp, Wp) row-major with the image placed at
        # [PM:PM+H, PM:PM+W]; each row is one contiguous W-lane store.
        for h in range(H):
            dst = (PM + h) * Wp + PM
            pad_ref[:, dst:dst + W] = act[:, h * W:(h + 1) * W]

        # im2col: every (ky, kx) tap of the dilated conv is a *contiguous*
        # lane slice of the flat buffer (length H*Wp), so the whole patch is
        # 9 slices + one sublane concat, feeding a single MXU matmul.
        taps = []
        for ky in range(K):
            for kx in range(K):
                off = (PM + (ky - 1) * d) * Wp + (PM + (kx - 1) * d)
                taps.append(pad_ref[:, off:off + HWp])              # (C, H*Wp)
        patch = jnp.concatenate(taps, axis=0)                       # (K*K*C, H*Wp)

        # (Cout, K*K*Cin) @ (K*K*Cin, H*Wp) -> (Cout, H*Wp), f32 accumulate.
        dense = jnp.dot(w_ref[b], patch, preferred_element_type=jnp.float32)
        dense = dense + b_ref[b]                                    # (Cout, 1) bcast

        # Drop the 2*PM padded-width garbage columns of each row and emit one
        # lane-dense (C, H*W) store into this branch's channel slab.
        compact = jnp.concatenate(
            [dense[:, h * Wp:h * Wp + W] for h in range(H)], axis=1)
        c0 = b * C
        o_ref[0, c0:c0 + C, :] = compact.astype(o_ref.dtype)


def fused_caspp_branches(x_flat, scales, shifts, w_mats, biases, *, H, W, dils):
    """x_flat: (N, C, H*W); scales/shifts/biases: (3, C, 1); w_mats: (3, C, 9*C).
    Returns the channel-concatenated branch outputs, shape (N, 3*C, H*W)."""
    N, C, HW = x_flat.shape
    K = 3
    PM = max(dils)                       # shared padded geometry (pad == dilation)
    Wp = W + 2 * PM
    max_off = max((PM + (K - 2) * d) * Wp + PM + (K - 2) * d for d in dils)
    flat = _round_up(max(max_off + H * Wp, (H + 2 * PM) * Wp), 128)

    kernel = functools.partial(_fused_branches_kernel,
                               C=C, H=H, W=W, PM=PM, dils=tuple(dils), K=K)

    return pl.pallas_call(
        kernel,
        out_shape=jax.ShapeDtypeStruct((N, 3 * C, HW), x_flat.dtype),
        grid_spec=pltpu.PrefetchScalarGridSpec(
            num_scalar_prefetch=0,
            grid=(N,),
            in_specs=[
                pl.BlockSpec((1, C, HW), lambda n: (n, 0, 0)),
                pl.BlockSpec((3, C, 1), lambda n: (0, 0, 0)),
                pl.BlockSpec((3, C, 1), lambda n: (0, 0, 0)),
                pl.BlockSpec((3, C, K * K * C), lambda n: (0, 0, 0)),
                pl.BlockSpec((3, C, 1), lambda n: (0, 0, 0)),
            ],
            out_specs=pl.BlockSpec((1, 3 * C, HW), lambda n: (n, 0, 0)),
            scratch_shapes=[pltpu.VMEM((C, flat), jnp.float32)],
        ),
        compiler_params=pltpu.CompilerParams(
            dimension_semantics=("parallel",),
            vmem_limit_bytes=16 * 1024 * 1024),   # tiny working set; v7x-safe
    )(x_flat, scales, shifts, w_mats, biases)


# ----------------------------------------------------------------------------
# Kernel 2: final BRC  (BN -> ReLU -> KxK conv, stride=scale, pad=padding)
# ----------------------------------------------------------------------------
def _final_brc_kernel(x_ref, sc_ref, sh_ref, w_ref, b_ref, o_ref, pad_ref, *,
                      Cin, Cout, H, W, K, pad, stride, Hout, Wout):
    Wp = W + 2 * pad
    HD = (Hout - 1) * stride + 1          # dense output rows actually needed
    HDWp = HD * Wp

    pad_ref[...] = jnp.zeros_like(pad_ref)

    x = x_ref[0]                                                     # (Cin, H*W)
    act = jnp.maximum(x * sc_ref[...] + sh_ref[...], 0.0)

    for h in range(H):
        dst = (pad + h) * Wp + pad
        pad_ref[:, dst:dst + W] = act[:, h * W:(h + 1) * W]

    taps = []
    for ky in range(K):
        for kx in range(K):
            off = ky * Wp + kx
            taps.append(pad_ref[:, off:off + HDWp])                  # (Cin, HD*Wp)
    patch = jnp.concatenate(taps, axis=0)                            # (K*K*Cin, HD*Wp)

    dense = jnp.dot(w_ref[...], patch, preferred_element_type=jnp.float32)
    dense = dense + b_ref[...]                                       # (Cout, HD*Wp)

    if stride == 1:
        rows = [dense[:, oy * Wp:oy * Wp + Wout] for oy in range(Hout)]
    else:
        # TODO(synk): strided lane subsample is unexercised here (scale=1 in the
        # test config); a strided-store formulation would be preferable on TPU.
        rows = [dense[:, oy * stride * Wp:
                         oy * stride * Wp + (Wout - 1) * stride + 1:stride]
                for oy in range(Hout)]
    compact = jnp.concatenate(rows, axis=1)                          # (Cout, Hout*Wout)
    o_ref[0, :, :] = compact.astype(o_ref.dtype)


def final_brc(x_flat, scale_vec, shift_vec, w_mat, bias, *, H, W, K, pad, stride):
    N, Cin, HW = x_flat.shape
    Cout = w_mat.shape[0]
    Hout = (H + 2 * pad - (K - 1) - 1) // stride + 1
    Wout = (W + 2 * pad - (K - 1) - 1) // stride + 1
    Wp = W + 2 * pad
    HD = (Hout - 1) * stride + 1
    flat = _round_up(max((K - 1) * (Wp + 1) + HD * Wp, (H + 2 * pad) * Wp), 128)

    kernel = functools.partial(_final_brc_kernel, Cin=Cin, Cout=Cout, H=H, W=W,
                               K=K, pad=pad, stride=stride, Hout=Hout, Wout=Wout)

    out = pl.pallas_call(
        kernel,
        out_shape=jax.ShapeDtypeStruct((N, Cout, Hout * Wout), x_flat.dtype),
        grid_spec=pltpu.PrefetchScalarGridSpec(
            num_scalar_prefetch=0,
            grid=(N,),
            in_specs=[
                pl.BlockSpec((1, Cin, HW), lambda n: (n, 0, 0)),
                pl.BlockSpec((Cin, 1), lambda n: (0, 0)),
                pl.BlockSpec((Cin, 1), lambda n: (0, 0)),
                pl.BlockSpec((Cout, K * K * Cin), lambda n: (0, 0)),
                pl.BlockSpec((Cout, 1), lambda n: (0, 0)),
            ],
            out_specs=pl.BlockSpec((1, Cout, Hout * Wout), lambda n: (n, 0, 0)),
            scratch_shapes=[pltpu.VMEM((Cin, flat), jnp.float32)],
        ),
        compiler_params=pltpu.CompilerParams(
            dimension_semantics=("parallel",),
            vmem_limit_bytes=16 * 1024 * 1024),
    )(x_flat, scale_vec, shift_vec, w_mat, bias)
    return out, Hout, Wout


# ----------------------------------------------------------------------------
# Parameter helpers / forward
# ----------------------------------------------------------------------------
def _bn_stats(x_flat, eps=1e-5):
    # training-mode BatchNorm2d statistics (biased variance) per channel
    mean = jnp.mean(x_flat, axis=(0, 2))
    var = jnp.mean((x_flat - mean[None, :, None]) ** 2, axis=(0, 2))
    return mean, 1.0 / jnp.sqrt(var + eps)


def _w_to_mat(w_hwio):
    # (K, K, Cin, Cout) -> (Cout, K*K*Cin), column index = (ky*K + kx)*Cin + ci
    Kh, Kw, Cin, Cout = w_hwio.shape
    return (jnp.transpose(w_hwio, (3, 0, 1, 2))
            .reshape(Cout, Kh * Kw * Cin).astype(jnp.float32))


def init_params(key, in_channels, kernel_size):
    C = in_channels
    ks = jax.random.split(key, 8)

    def conv_w(k, kk, cin, cout):
        return 0.1 * jax.random.normal(k, (kk, kk, cin, cout), jnp.float32)

    def conv_b(k, cout):
        return 0.05 * jax.random.normal(k, (cout,), jnp.float32)

    return {
        # (bn_gamma, bn_beta, conv_w HWIO, conv_b)
        "brc1": (jnp.ones((C,), jnp.float32), jnp.zeros((C,), jnp.float32),
                 conv_w(ks[0], 3, C, C), conv_b(ks[1], C)),
        "brc2": (jnp.ones((C,), jnp.float32), jnp.zeros((C,), jnp.float32),
                 conv_w(ks[2], 3, C, C), conv_b(ks[3], C)),
        "brc3": (jnp.ones((C,), jnp.float32), jnp.zeros((C,), jnp.float32),
                 conv_w(ks[4], 3, C, C), conv_b(ks[5], C)),
        "brc": (jnp.ones((3 * C,), jnp.float32), jnp.zeros((3 * C,), jnp.float32),
                conv_w(ks[6], kernel_size, 3 * C, C), conv_b(ks[7], C)),
    }


def casppfortransformer_forward(x_nchw, params, *, scale, kernel_size, padding,
                                eps=1e-5):
    N, C, H, W = x_nchw.shape
    x_flat = x_nchw.reshape(N, C, H * W)          # free row-major view, no copy

    # ---- three dilated BRC_caspp branches, fused into one pallas_call -------
    mean, inv = _bn_stats(x_flat, eps)            # shared batch stats, once
    dils = (2, 4, 6)
    sc, sh, wm, bs = [], [], [], []
    for name in ("brc1", "brc2", "brc3"):
        gamma, beta, w_hwio, bias = params[name]
        s = gamma * inv
        sc.append(s)
        sh.append(beta - mean * s)
        wm.append(_w_to_mat(w_hwio))
        bs.append(bias)
    scales = jnp.stack(sc).reshape(3, C, 1).astype(jnp.float32)
    shifts = jnp.stack(sh).reshape(3, C, 1).astype(jnp.float32)
    w_mats = jnp.stack(wm)                                   # (3, C, 9*C)
    biases = jnp.stack(bs).reshape(3, C, 1).astype(jnp.float32)

    x_all = fused_caspp_branches(x_flat, scales, shifts, w_mats, biases,
                                 H=H, W=W, dils=dils)        # (N, 3C, H*W)

    # ---- final BRC -----------------------------------------------------------
    gamma, beta, w_hwio, bias = params["brc"]
    mean2, inv2 = _bn_stats(x_all, eps)
    s2 = (gamma * inv2).reshape(3 * C, 1).astype(jnp.float32)
    t2 = (beta - mean2 * gamma * inv2).reshape(3 * C, 1).astype(jnp.float32)
    w2 = _w_to_mat(w_hwio)                                   # (C, K*K*3C)
    b2 = bias.reshape(C, 1).astype(jnp.float32)

    out_flat, Hout, Wout = final_brc(x_all, s2, t2, w2, b2, H=H, W=W,
                                     K=kernel_size, pad=padding, stride=scale)
    return out_flat.reshape(N, C, Hout, Wout)                # free view


# ----------------------------------------------------------------------------
# Pure-JAX reference (for correctness check)
# ----------------------------------------------------------------------------
def _brc_ref(x_nhwc, gamma, beta, w_hwio, bias, *, K, dil, stride, pad,
             eps=1e-5):
    mean = jnp.mean(x_nhwc, axis=(0, 1, 2))
    var = jnp.mean((x_nhwc - mean) ** 2, axis=(0, 1, 2))
    act = jnp.maximum((x_nhwc - mean) / jnp.sqrt(var + eps) * gamma + beta, 0.0)
    out = lax.conv_general_dilated(
        act, w_hwio, window_strides=(stride, stride),
        padding=[(pad, pad), (pad, pad)], rhs_dilation=(dil, dil),
        dimension_numbers=("NHWC", "HWIO", "NHWC"))
    return out + bias


def casppfortransformer_ref(x_nchw, params, *, scale, kernel_size, padding):
    x = jnp.transpose(x_nchw, (0, 2, 3, 1))
    x1 = _brc_ref(x, *params["brc1"], K=3, dil=2, stride=1, pad=2)
    x2 = _brc_ref(x, *params["brc2"], K=3, dil=4, stride=1, pad=4)
    x3 = _brc_ref(x, *params["brc3"], K=3, dil=6, stride=1, pad=6)
    x_all = jnp.concatenate((x1, x2, x3), axis=-1)
    x_out = _brc_ref(x_all, *params["brc"], K=kernel_size, dil=1,
                     stride=scale, pad=padding)
    return jnp.transpose(x_out, (0, 3, 1, 2))


# ----------------------------------------------------------------------------
if __name__ == "__main__":
    key = jax.random.PRNGKey(0)
    k_x, k_p = jax.random.split(key)

    # module config: casppfortransformer(in_channels=4, out_channels=4,
    #                                    scale=1, kernel_size=3, padding=1)
    N, C, H, W = 2, 4, 16, 16
    scale, kernel_size, padding = 1, 3, 1

    x = jax.random.normal(k_x, (N, C, H, W), jnp.float32)   # NCHW, like PyTorch
    params = init_params(k_p, in_channels=C, kernel_size=kernel_size)

    out = casppfortransformer_forward(x, params, scale=scale,
                                      kernel_size=kernel_size, padding=padding)
    out = jax.block_until_ready(out)

    ref = jax.block_until_ready(
        casppfortransformer_ref(x, params, scale=scale,
                                kernel_size=kernel_size, padding=padding))

    assert out.shape == (N, C, H, W), out.shape
    np.testing.assert_allclose(np.asarray(out), np.asarray(ref),
                               rtol=1e-2, atol=1e-2)
    print("KERNEL_OK")
</pallas_src>

<mosaic_0001>
module attributes {stable_mosaic.version = 11 : i64} {
  func.func @_fused_branches_kernel(%arg0: i32, %arg1: memref<1x4x256xf32, #tpu.memory_space<vmem>>, %arg2: memref<3x4x1xf32, #tpu.memory_space<vmem>>, %arg3: memref<3x4x1xf32, #tpu.memory_space<vmem>>, %arg4: memref<3x4x36xf32, #tpu.memory_space<vmem>>, %arg5: memref<3x4x1xf32, #tpu.memory_space<vmem>>, %arg6: memref<1x12x256xf32, #tpu.memory_space<vmem>>, %arg7: memref<4x896xf32, #tpu.memory_space<vmem>>) attributes {dimension_semantics = [#tpu.dimension_semantics<parallel>], iteration_bounds = array<i64: 2>, scalar_prefetch = 0 : i64, scratch_operands = 1 : i64, tpu.core_type = #tpu.core_type<tc>, window_params = [{transform_indices = @transform_0, window_bounds = array<i64: 1, 4, 256>}, {pipeline_mode = #tpu.pipeline_mode<synchronous>, transform_indices = @transform_1, window_bounds = array<i64: 3, 4, 1>}, {pipeline_mode = #tpu.pipeline_mode<synchronous>, transform_indices = @transform_2, window_bounds = array<i64: 3, 4, 1>}, {pipeline_mode = #tpu.pipeline_mode<synchronous>, transform_indices = @transform_3, window_bounds = array<i64: 3, 4, 36>}, {pipeline_mode = #tpu.pipeline_mode<synchronous>, transform_indices = @transform_4, window_bounds = array<i64: 3, 4, 1>}, {transform_indices = @transform_5, window_bounds = array<i64: 1, 12, 256>}]} {
    %cst = arith.constant 0.000000e+00 : f32
    %0 = vector.broadcast %cst : f32 to vector<4x896xf32>
    %c0 = arith.constant 0 : index
    %c0_0 = arith.constant 0 : index
    %1 = vector.load %arg7[%c0, %c0_0] : memref<4x896xf32, #tpu.memory_space<vmem>>, vector<4x896xf32>
    tpu.vector_store %arg7[%c0, %c0_0], %0 {strides = array<i32>} : memref<4x896xf32, #tpu.memory_space<vmem>>, vector<4x896xf32>,
    %c0_1 = arith.constant 0 : index
    %c0_2 = arith.constant 0 : index
    %c0_3 = arith.constant 0 : index
    %2 = vector.load %arg1[%c0_1, %c0_2, %c0_3] : memref<1x4x256xf32, #tpu.memory_space<vmem>>, vector<1x4x256xf32>
    %3 = vector.shape_cast %2 : vector<1x4x256xf32> to vector<4x256xf32>
    %c0_4 = arith.constant 0 : index
    %c0_5 = arith.constant 0 : index
    %c0_6 = arith.constant 0 : index
    %4 = vector.load %arg2[%c0_4, %c0_5, %c0_6] : memref<3x4x1xf32, #tpu.memory_space<vmem>>, vector<1x4x1xf32>
    %5 = vector.shape_cast %4 : vector<1x4x1xf32> to vector<4x1xf32>
    %6 = vector.broadcast %5 : vector<4x1xf32> to vector<4x256xf32>
    %7 = arith.mulf %3, %6 : vector<4x256xf32>
    %c0_7 = arith.constant 0 : index
    %c0_8 = arith.constant 0 : index
    %c0_9 = arith.constant 0 : index
    %8 = vector.load %arg3[%c0_7, %c0_8, %c0_9] : memref<3x4x1xf32, #tpu.memory_space<vmem>>, vector<1x4x1xf32>
    %9 = vector.shape_cast %8 : vector<1x4x1xf32> to vector<4x1xf32>
    %10 = vector.broadcast %9 : vector<4x1xf32> to vector<4x256xf32>
    %11 = arith.addf %7, %10 : vector<4x256xf32>
    %cst_10 = arith.constant 0.000000e+00 : f32
    %12 = vector.broadcast %cst_10 : f32 to vector<4x256xf32>
    %13 = arith.maximumf %11, %12 : vector<4x256xf32>
    %14 = vector.extract_strided_slice %13 {offsets = [0, 0], sizes = [4, 16], strides = [1, 1]} : vector<4x256xf32> to vector<4x16xf32>
    %c0_11 = arith.constant 0 : index
    %c174 = arith.constant 174 : index
    %15 = vector.load %arg7[%c0_11, %c174] : memref<4x896xf32, #tpu.memory_space<vmem>>, vector<4x16xf32>
    tpu.vector_store %arg7[%c0_11, %c174], %14 {strides = array<i32>} : memref<4x896xf32, #tpu.memory_space<vmem>>, vector<4x16xf32>,
    %16 = vector.extract_strided_slice %13 {offsets = [0, 16], sizes = [4, 16], strides = [1, 1]} : vector<4x256xf32> to vector<4x16xf32>
    %c0_12 = arith.constant 0 : index
    %c202 = arith.constant 202 : index
    %17 = vector.load %arg7[%c0_12, %c202] : memref<4x896xf32, #tpu.memory_space<vmem>>, vector<4x16xf32>
    tpu.vector_store %arg7[%c0_12, %c202], %16 {strides = array<i32>} : memref<4x896xf32, #tpu.memory_space<vmem>>, vector<4x16xf32>,
    %18 = vector.extract_strided_slice %13 {offsets = [0, 32], sizes = [4, 16], strides = [1, 1]} : vector<4x256xf32> to vector<4x16xf32>
    %c0_13 = arith.constant 0 : index
    %c230 = arith.constant 230 : index
    %19 = vector.load %arg7[%c0_13, %c230] : memref<4x896xf32, #tpu.memory_space<vmem>>, vector<4x16xf32>
    tpu.vector_store %arg7[%c0_13, %c230], %18 {strides = array<i32>} : memref<4x896xf32, #tpu.memory_space<vmem>>, vector<4x16xf32>,
    %20 = vector.extract_strided_slice %13 {offsets = [0, 48], sizes = [4, 16], strides = [1, 1]} : vector<4x256xf32> to vector<4x16xf32>
    %c0_14 = arith.constant 0 : index
    %c258 = arith.constant 258 : index
    %21 = vector.load %arg7[%c0_14, %c258] : memref<4x896xf32, #tpu.memory_space<vmem>>, vector<4x16xf32>
    tpu.vector_store %arg7[%c0_14, %c258], %20 {strides = array<i32>} : memref<4x896xf32, #tpu.memory_space<vmem>>, vector<4x16xf32>,
    %22 = vector.extract_strided_slice %13 {offsets = [0, 64], sizes = [4, 16], strides = [1, 1]} : vector<4x256xf32> to vector<4x16xf32>
    %c0_15 = arith.constant 0 : index
    %c286 = arith.constant 286 : index
    %23 = vector.load %arg7[%c0_15, %c286] : memref<4x896xf32, #tpu.memory_space<vmem>>, vector<4x16xf32>
    tpu.vector_store %arg7[%c0_15, %c286], %22 {strides = array<i32>} : memref<4x896xf32, #tpu.memory_space<vmem>>, vector<4x16xf32>,
    %24 = vector.extract_strided_slice %13 {offsets = [0, 80], sizes = [4, 16], strides = [1, 1]} : vector<4x256xf32> to vector<4x16xf32>
    %c0_16 = arith.constant 0 : index
    %c314 = arith.constant 314 : index
    %25 = vector.load %arg7[%c0_16, %c314] : memref<4x896xf32, #tpu.memory_space<vmem>>, vector<4x16xf32>
    tpu.vector_store %arg7[%c0_16, %c314], %24 {strides = array<i32>} : memref<4x896xf32, #tpu.memory_space<vmem>>, vector<4x16xf32>,
    %26 = vector.extract_strided_slice %13 {offsets = [0, 96], sizes = [4, 16], strides = [1, 1]} : vector<4x256xf32> to vector<4x16xf32>
    %c0_17 = arith.constant 0 : index
    %c342 = arith.constant 342 : index
    %27 = vector.load %arg7[%c0_17, %c342] : memref<4x896xf32, #tpu.memory_space<vmem>>, vector<4x16xf32>
    tpu.vector_store %arg7[%c0_17, %c342], %26 {strides = array<i32>} : memref<4x896xf32, #tpu.memory_space<vmem>>, vector<4x16xf32>,
    %28 = vector.extract_strided_slice %13 {offsets = [0, 112], sizes = [4, 16], strides = [1, 1]} : vector<4x256xf32> to vector<4x16xf32>
    %c0_18 = arith.constant 0 : index
    %c370 = arith.constant 370 : index
    %29 = vector.load %arg7[%c0_18, %c370] : memref<4x896xf32, #tpu.memory_space<vmem>>, vector<4x16xf32>
    tpu.vector_store %arg7[%c0_18, %c370], %28 {strides = array<i32>} : memref<4x896xf32, #tpu.memory_space<vmem>>, vector<4x16xf32>,
    %30 = vector.extract_strided_slice %13 {offsets = [0, 128], sizes = [4, 16], strides = [1, 1]} : vector<4x256xf32> to vector<4x16xf32>
    %c0_19 = arith.constant 0 : index
    %c398 = arith.constant 398 : index
    %31 = vector.load %arg7[%c0_19, %c398] : memref<4x896xf32, #tpu.memory_space<vmem>>, vector<4x16xf32>
    tpu.vector_store %arg7[%c0_19, %c398], %30 {strides = array<i32>} : memref<4x896xf32, #tpu.memory_space<vmem>>, vector<4x16xf32>,
    %32 = vector.extract_strided_slice %13 {offsets = [0, 144], sizes = [4, 16], strides = [1, 1]} : vector<4x256xf32> to vector<4x16xf32>
    %c0_20 = arith.constant 0 : index
    %c426 = arith.constant 426 : index
    %33 = vector.load %arg7[%c0_20, %c426] : memref<4x896xf32, #tpu.memory_space<vmem>>, vector<4x16xf32>
    tpu.vector_store %arg7[%c0_20, %c426], %32 {strides = array<i32>} : memref<4x896xf32, #tpu.memory_space<vmem>>, vector<4x16xf32>,
    %34 = vector.extract_strided_slice %13 {offsets = [0, 160], sizes = [4, 16], strides = [1, 1]} : vector<4x256xf32> to vector<4x16xf32>
    %c0_21 = arith.constant 0 : index
    %c454 = arith.constant 454 : index
    %35 = vector.load %arg7[%c0_21, %c454] : memref<4x896xf32, #tpu.memory_space<vmem>>, vector<4x16xf32>
    tpu.vector_store %arg7[%c0_21, %c454], %34 {strides = array<i32>} : memref<4x896xf32, #tpu.memory_space<vmem>>, vector<4x16xf32>,
    %36 = vector.extract_strided_slice %13 {offsets = [0, 176], sizes = [4, 16], strides = [1, 1]} : vector<4x256xf32> to vector<4x16xf32>
    %c0_22 = arith.constant 0 : index
    %c482 = arith.constant 482 : index
    %37 = vector.load %arg7[%c0_22, %c482] : memref<4x896xf32, #tpu.memory_space<vmem>>, vector<4x16xf32>
    tpu.vector_store %arg7[%c0_22, %c482], %36 {strides = array<i32>} : memref<4x896xf32, #tpu.memory_space<vmem>>, vector<4x16xf32>,
    %38 = vector.extract_strided_slice %13 {offsets = [0, 192], sizes = [4, 16], strides = [1, 1]} : vector<4x256xf32> to vector<4x16xf32>
    %c0_23 = arith.constant 0 : index
    %c510 = arith.constant 510 : index
    %39 = vector.load %arg7[%c0_23, %c510] : memref<4x896xf32, #tpu.memory_space<vmem>>, vector<4x16xf32>
    tpu.vector_store %arg7[%c0_23, %c510], %38 {strides = array<i32>} : memref<4x896xf32, #tpu.memory_space<vmem>>, vector<4x16xf32>,
    %40 = vector.extract_strided_slice %13 {offsets = [0, 208], sizes = [4, 16], strides = [1, 1]} : vector<4x256xf32> to vector<4x16xf32>
    %c0_24 = arith.constant 0 : index
    %c538 = arith.constant 538 : index
    %41 = vector.load %arg7[%c0_24, %c538] : memref<4x896xf32, #tpu.memory_space<vmem>>, vector<4x16xf32>
    tpu.vector_store %arg7[%c0_24, %c538], %40 {strides = array<i32>} : memref<4x896xf32, #tpu.memory_space<vmem>>, vector<4x16xf32>,
    %42 = vector.extract_strided_slice %13 {offsets = [0, 224], sizes = [4, 16], strides = [1, 1]} : vector<4x256xf32> to vector<4x16xf32>
    %c0_25 = arith.constant 0 : index
    %c566 = arith.constant 566 : index
    %43 = vector.load %arg7[%c0_25, %c566] : memref<4x896xf32, #tpu.memory_space<vmem>>, vector<4x16xf32>
    tpu.vector_store %arg7[%c0_25, %c566], %42 {strides = array<i32>} : memref<4x896xf32, #tpu.memory_space<vmem>>, vector<4x16xf32>,
    %44 = vector.extract_strided_slice %13 {offsets = [0, 240], sizes = [4, 16], strides = [1, 1]} : vector<4x256xf32> to vector<4x16xf32>
    %c0_26 = arith.constant 0 : index
    %c594 = arith.constant 594 : index
    %45 = vector.load %arg7[%c0_26, %c594] : memref<4x896xf32, #tpu.memory_space<vmem>>, vector<4x16xf32>
    tpu.vector_store %arg7[%c0_26, %c594], %44 {strides = array<i32>} : memref<4x896xf32, #tpu.memory_space<vmem>>, vector<4x16xf32>,
    %c0_27 = arith.constant 0 : index
    %c116 = arith.constant 116 : index
    %46 = vector.load %arg7[%c0_27, %c116] : memref<4x896xf32, #tpu.memory_space<vmem>>, vector<4x448xf32>
    %c0_28 = arith.constant 0 : index
    %c118 = arith.constant 118 : index
    %47 = vector.load %arg7[%c0_28, %c118] : memref<4x896xf32, #tpu.memory_space<vmem>>, vector<4x448xf32>
    %c0_29 = arith.constant 0 : index
    %c120 = arith.constant 120 : index
    %48 = vector.load %arg7[%c0_29, %c120] : memref<4x896xf32, #tpu.memory_space<vmem>>, vector<4x448xf32>
    %c0_30 = arith.constant 0 : index
    %c172 = arith.constant 172 : index
    %49 = vector.load %arg7[%c0_30, %c172] : memref<4x896xf32, #tpu.memory_space<vmem>>, vector<4x448xf32>
    %c0_31 = arith.constant 0 : index
    %c174_32 = arith.constant 174 : index
    %50 = vector.load %arg7[%c0_31, %c174_32] : memref<4x896xf32, #tpu.memory_space<vmem>>, vector<4x448xf32>
    %c0_33 = arith.constant 0 : index
    %c176 = arith.constant 176 : index
    %51 = vector.load %arg7[%c0_33, %c176] : memref<4x896xf32, #tpu.memory_space<vmem>>, vector<4x448xf32>
    %c0_34 = arith.constant 0 : index
    %c228 = arith.constant 228 : index
    %52 = vector.load %arg7[%c0_34, %c228] : memref<4x896xf32, #tpu.memory_space<vmem>>, vector<4x448xf32>
    %c0_35 = arith.constant 0 : index
    %c230_36 = arith.constant 230 : index
    %53 = vector.load %arg7[%c0_35, %c230_36] : memref<4x896xf32, #tpu.memory_space<vmem>>, vector<4x448xf32>
    %c0_37 = arith.constant 0 : index
    %c232 = arith.constant 232 : index
    %54 = vector.load %arg7[%c0_37, %c232] : memref<4x896xf32, #tpu.memory_space<vmem>>, vector<4x448xf32>
    %55 = tpu.concatenate %46, %47, %48, %49, %50, %51, %52, %53, %54 in 0 : vector<4x448xf32>, vector<4x448xf32>, vector<4x448xf32>, vector<4x448xf32>, vector<4x448xf32>, vector<4x448xf32>, vector<4x448xf32>, vector<4x448xf32>, vector<4x448xf32> -> vector<36x448xf32>
    %c0_38 = arith.constant 0 : index
    %c0_39 = arith.constant 0 : index
    %c0_40 = arith.constant 0 : index
    %56 = vector.load %arg4[%c0_38, %c0_39, %c0_40] : memref<3x4x36xf32, #tpu.memory_space<vmem>>, vector<1x4x36xf32>
    %57 = vector.shape_cast %56 : vector<1x4x36xf32> to vector<4x36xf32>
    %cst_41 = arith.constant dense<0.000000e+00> : vector<4x448xf32>
    %58 = tpu.matmul %57, %55, %cst_41 {dimension_numbers = #tpu.dot_dimension_numbers<[1], [0], [0], [1], [0, 0, 1, 1], [], []>} : vector<4x36xf32>, vector<36x448xf32>, vector<4x448xf32> -> vector<4x448xf32>
    %c0_42 = arith.constant 0 : index
    %c0_43 = arith.constant 0 : index
    %c0_44 = arith.constant 0 : index
    %59 = vector.load %arg5[%c0_42, %c0_43, %c0_44] : memref<3x4x1xf32, #tpu.memory_space<vmem>>, vector<1x4x1xf32>
    %60 = vector.shape_cast %59 : vector<1x4x1xf32> to vector<4x1xf32>
    %61 = vector.broadcast %60 : vector<4x1xf32> to vector<4x448xf32>
    %62 = arith.addf %58, %61 : vector<4x448xf32>
    %63 = vector.extract_strided_slice %62 {offsets = [0, 0], sizes = [4, 16], strides = [1, 1]} : vector<4x448xf32> to vector<4x16xf32>
    %64 = vector.extract_strided_slice %62 {offsets = [0, 28], sizes = [4, 16], strides = [1, 1]} : vector<4x448xf32> to vector<4x16xf32>
    %65 = vector.extract_strided_slice %62 {offsets = [0, 56], sizes = [4, 16], strides = [1, 1]} : vector<4x448xf32> to vector<4x16xf32>
    %66 = vector.extract_strided_slice %62 {offsets = [0, 84], sizes = [4, 16], strides = [1, 1]} : vector<4x448xf32> to vector<4x16xf32>
    %67 = vector.extract_strided_slice %62 {offsets = [0, 112], sizes = [4, 16], strides = [1, 1]} : vector<4x448xf32> to vector<4x16xf32>
    %68 = vector.extract_strided_slice %62 {offsets = [0, 140], sizes = [4, 16], strides = [1, 1]} : vector<4x448xf32> to vector<4x16xf32>
    %69 = vector.extract_strided_slice %62 {offsets = [0, 168], sizes = [4, 16], strides = [1, 1]} : vector<4x448xf32> to vector<4x16xf32>
    %70 = vector.extract_strided_slice %62 {offsets = [0, 196], sizes = [4, 16], strides = [1, 1]} : vector<4x448xf32> to vector<4x16xf32>
    %71 = vector.extract_strided_slice %62 {offsets = [0, 224], sizes = [4, 16], strides = [1, 1]} : vector<4x448xf32> to vector<4x16xf32>
    %72 = vector.extract_strided_slice %62 {offsets = [0, 252], sizes = [4, 16], strides = [1, 1]} : vector<4x448xf32> to vector<4x16xf32>
    %73 = vector.extract_strided_slice %62 {offsets = [0, 280], sizes = [4, 16], strides = [1, 1]} : vector<4x448xf32> to vector<4x16xf32>
    %74 = vector.extract_strided_slice %62 {offsets = [0, 308], sizes = [4, 16], strides = [1, 1]} : vector<4x448xf32> to vector<4x16xf32>
    %75 = vector.extract_strided_slice %62 {offsets = [0, 336], sizes = [4, 16], strides = [1, 1]} : vector<4x448xf32> to vector<4x16xf32>
    %76 = vector.extract_strided_slice %62 {offsets = [0, 364], sizes = [4, 16], strides = [1, 1]} : vector<4x448xf32> to vector<4x16xf32>
    %77 = vector.extract_strided_slice %62 {offsets = [0, 392], sizes = [4, 16], strides = [1, 1]} : vector<4x448xf32> to vector<4x16xf32>
    %78 = vector.extract_strided_slice %62 {offsets = [0, 420], sizes = [4, 16], strides = [1, 1]} : vector<4x448xf32> to vector<4x16xf32>
    %79 = tpu.concatenate %63, %64, %65, %66, %67, %68, %69, %70, %71, %72, %73, %74, %75, %76, %77, %78 in 1 : vector<4x16xf32>, vector<4x16xf32>, vector<4x16xf32>, vector<4x16xf32>, vector<4x16xf32>, vector<4x16xf32>, vector<4x16xf32>, vector<4x16xf32>, vector<4x16xf32>, vector<4x16xf32>, vector<4x16xf32>, vector<4x16xf32>, vector<4x16xf32>, vector<4x16xf32>, vector<4x16xf32>, vector<4x16xf32> -> vector<4x256xf32>
    %c0_45 = arith.constant 0 : index
    %c0_46 = arith.constant 0 : index
    %c0_47 = arith.constant 0 : index
    %80 = vector.load %arg6[%c0_45, %c0_46, %c0_47] : memref<1x12x256xf32, #tpu.memory_space<vmem>>, vector<1x4x256xf32>
    %81 = vector.shape_cast %80 : vector<1x4x256xf32> to vector<4x256xf32>
    %82 = vector.shape_cast %79 : vector<4x256xf32> to vector<1x4x256xf32>
    tpu.vector_store %arg6[%c0_45, %c0_46, %c0_47], %82 {strides = array<i32>} : memref<1x12x256xf32, #tpu.memory_space<vmem>>, vector<1x4x256xf32>,
    %c1 = arith.constant 1 : index
    %c0_48 = arith.constant 0 : index
    %c0_49 = arith.constant 0 : index
    %83 = vector.load %arg2[%c1, %c0_48, %c0_49] : memref<3x4x1xf32, #tpu.memory_space<vmem>>, vector<1x4x1xf32>
    %84 = vector.shape_cast %83 : vector<1x4x1xf32> to vector<4x1xf32>
    %85 = vector.broadcast %84 : vector<4x1xf32> to vector<4x256xf32>
    %86 = arith.mulf %3, %85 : vector<4x256xf32>
    %c1_50 = arith.constant 1 : index
    %c0_51 = arith.constant 0 : index
    %c0_52 = arith.constant 0 : index
    %87 = vector.load %arg3[%c1_50, %c0_51, %c0_52] : memref<3x4x1xf32, #tpu.memory_space<vmem>>, vector<1x4x1xf32>
    %88 = vector.shape_cast %87 : vector<1x4x1xf32> to vector<4x1xf32>
    %89 = vector.broadcast %88 : vector<4x1xf32> to vector<4x256xf32>
    %90 = arith.addf %86, %89 : vector<4x256xf32>
    %cst_53 = arith.constant 0.000000e+00 : f32
    %91 = vector.broadcast %cst_53 : f32 to vector<4x256xf32>
    %92 = arith.maximumf %90, %91 : vector<4x256xf32>
    %93 = vector.extract_strided_slice %92 {offsets = [0, 0], sizes = [4, 16], strides = [1, 1]} : vector<4x256xf32> to vector<4x16xf32>
    %c0_54 = arith.constant 0 : index
    %c174_55 = arith.constant 174 : index
    %94 = vector.load %arg7[%c0_54, %c174_55] : memref<4x896xf32, #tpu.memory_space<vmem>>, vector<4x16xf32>
    tpu.vector_store %arg7[%c0_54, %c174_55], %93 {strides = array<i32>} : memref<4x896xf32, #tpu.memory_space<vmem>>, vector<4x16xf32>,
    %95 = vector.extract_strided_slice %92 {offsets = [0, 16], sizes = [4, 16], strides = [1, 1]} : vector<4x256xf32> to vector<4x16xf32>
    %c0_56 = arith.constant 0 : index
    %c202_57 = arith.constant 202 : index
    %96 = vector.load %arg7[%c0_56, %c202_57] : memref<4x896xf32, #tpu.memory_space<vmem>>, vector<4x16xf32>
    tpu.vector_store %arg7[%c0_56, %c202_57], %95 {strides = array<i32>} : memref<4x896xf32, #tpu.memory_space<vmem>>, vector<4x16xf32>,
    %97 = vector.extract_strided_slice %92 {offsets = [0, 32], sizes = [4, 16], strides = [1, 1]} : vector<4x256xf32> to vector<4x16xf32>
    %c0_58 = arith.constant 0 : index
    %c230_59 = arith.constant 230 : index
    %98 = vector.load %arg7[%c0_58, %c230_59] : memref<4x896xf32, #tpu.memory_space<vmem>>, vector<4x16xf32>
    tpu.vector_store %arg7[%c0_58, %c230_59], %97 {strides = array<i32>} : memref<4x896xf32, #tpu.memory_space<vmem>>, vector<4x16xf32>,
    %99 = vector.extract_strided_slice %92 {offsets = [0, 48], sizes = [4, 16], strides = [1, 1]} : vector<4x256xf32> to vector<4x16xf32>
    %c0_60 = arith.constant 0 : index
    %c258_61 = arith.constant 258 : index
    %100 = vector.load %arg7[%c0_60, %c258_61] : memref<4x896xf32, #tpu.memory_space<vmem>>, vector<4x16xf32>
    tpu.vector_store %arg7[%c0_60, %c258_61], %99 {strides = array<i32>} : memref<4x896xf32, #tpu.memory_space<vmem>>, vector<4x16xf32>,
    %101 = vector.extract_strided_slice %92 {offsets = [0, 64], sizes = [4, 16], strides = [1, 1]} : vector<4x256xf32> to vector<4x16xf32>
    %c0_62 = arith.constant 0 : index
    %c286_63 = arith.constant 286 : index
    %102 = vector.load %arg7[%c0_62, %c286_63] : memref<4x896xf32, #tpu.memory_space<vmem>>, vector<4x16xf32>
    tpu.vector_store %arg7[%c0_62, %c286_63], %101 {strides = array<i32>} : memref<4x896xf32, #tpu.memory_space<vmem>>, vector<4x16xf32>,
    %103 = vector.extract_strided_slice %92 {offsets = [0, 80], sizes = [4, 16], strides = [1, 1]} : vector<4x256xf32> to vector<4x16xf32>
    %c0_64 = arith.constant 0 : index
    %c314_65 = arith.constant 314 : index
    %104 = vector.load %arg7[%c0_64, %c314_65] : memref<4x896xf32, #tpu.memory_space<vmem>>, vector<4x16xf32>
    tpu.vector_store %arg7[%c0_64, %c314_65], %103 {strides = array<i32>} : memref<4x896xf32, #tpu.memory_space<vmem>>, vector<4x16xf32>,
    %105 = vector.extract_strided_slice %92 {offsets = [0, 96], sizes = [4, 16], strides = [1, 1]} : vector<4x256xf32> to vector<4x16xf32>
    %c0_66 = arith.constant 0 : index
    %c342_67 = arith.constant 342 : index
    %106 = vector.load %arg7[%c0_66, %c342_67] : memref<4x896xf32, #tpu.memory_space<vmem>>, vector<4x16xf32>
    tpu.vector_store %arg7[%c0_66, %c342_67], %105 {strides = array<i32>} : memref<4x896xf32, #tpu.memory_space<vmem>>, vector<4x16xf32>,
    %107 = vector.extract_strided_slice %92 {offsets = [0, 112], sizes = [4, 16], strides = [1, 1]} : vector<4x256xf32> to vector<4x16xf32>
    %c0_68 = arith.constant 0 : index
    %c370_69 = arith.constant 370 : index
    %108 = vector.load %arg7[%c0_68, %c370_69] : memref<4x896xf32, #tpu.memory_space<vmem>>, vector<4x16xf32>
    tpu.vector_store %arg7[%c0_68, %c370_69], %107 {strides = array<i32>} : memref<4x896xf32, #tpu.memory_space<vmem>>, vector<4x16xf32>,
    %109 = vector.extract_strided_slice %92 {offsets = [0, 128], sizes = [4, 16], strides = [1, 1]} : vector<4x256xf32> to vector<4x16xf32>
    %c0_70 = arith.constant 0 : index
    %c398_71 = arith.constant 398 : index
    %110 = vector.load %arg7[%c0_70, %c398_71] : memref<4x896xf32, #tpu.memory_space<vmem>>, vector<4x16xf32>
    tpu.vector_store %arg7[%c0_70, %c398_71], %109 {strides = array<i32>} : memref<4x896xf32, #tpu.memory_space<vmem>>, vector<4x16xf32>,
    %111 = vector.extract_strided_slice %92 {offsets = [0, 144], sizes = [4, 16], strides = [1, 1]} : vector<4x256xf32> to vector<4x16xf32>
    %c0_72 = arith.constant 0 : index
    %c426_73 = arith.constant 426 : index
    %112 = vector.load %arg7[%c0_72, %c426_73] : memref<4x896xf32, #tpu.memory_space<vmem>>, vector<4x16xf32>
    tpu.vector_store %arg7[%c0_72, %c426_73], %111 {strides = array<i32>} : memref<4x896xf32, #tpu.memory_space<vmem>>, vector<4x16xf32>,
    %113 = vector.extract_strided_slice %92 {offsets = [0, 160], sizes = [4, 16], strides = [1, 1]} : vector<4x256xf32> to vector<4x16xf32>
    %c0_74 = arith.constant 0 : index
    %c454_75 = arith.constant 454 : index
    %114 = vector.load %arg7[%c0_74, %c454_75] : memref<4x896xf32, #tpu.memory_space<vmem>>, vector<4x16xf32>
    tpu.vector_store %arg7[%c0_74, %c454_75], %113 {strides = array<i32>} : memref<4x896xf32, #tpu.memory_space<vmem>>, vector<4x16xf32>,
    %115 = vector.extract_strided_slice %92 {offsets = [0, 176], sizes = [4, 16], strides = [1, 1]} : vector<4x256xf32> to vector<4x16xf32>
    %c0_76 = arith.constant 0 : index
    %c482_77 = arith.constant 482 : index
    %116 = vector.load %arg7[%c0_76, %c482_77] : memref<4x896xf32, #tpu.memory_space<vmem>>, vector<4x16xf32>
    tpu.vector_store %arg7[%c0_76, %c482_77], %115 {strides = array<i32>} : memref<4x896xf32, #tpu.memory_space<vmem>>, vector<4x16xf32>,
    %117 = vector.extract_strided_slice %92 {offsets = [0, 192], sizes = [4, 16], strides = [1, 1]} : vector<4x256xf32> to vector<4x16xf32>
    %c0_78 = arith.constant 0 : index
    %c510_79 = arith.constant 510 : index
    %118 = vector.load %arg7[%c0_78, %c510_79] : memref<4x896xf32, #tpu.memory_space<vmem>>, vector<4x16xf32>
    tpu.vector_store %arg7[%c0_78, %c510_79], %117 {strides = array<i32>} : memref<4x896xf32, #tpu.memory_space<vmem>>, vector<4x16xf32>,
    %119 = vector.extract_strided_slice %92 {offsets = [0, 208], sizes = [4, 16], strides = [1, 1]} : vector<4x256xf32> to vector<4x16xf32>
    %c0_80 = arith.constant 0 : index
    %c538_81 = arith.constant 538 : index
    %120 = vector.load %arg7[%c0_80, %c538_81] : memref<4x896xf32, #tpu.memory_space<vmem>>, vector<4x16xf32>
    tpu.vector_store %arg7[%c0_80, %c538_81], %119 {strides = array<i32>} : memref<4x896xf32, #tpu.memory_space<vmem>>, vector<4x16xf32>,
    %121 = vector.extract_strided_slice %92 {offsets = [0, 224], sizes = [4, 16], strides = [1, 1]} : vector<4x256xf32> to vector<4x16xf32>
    %c0_82 = arith.constant 0 : index
    %c566_83 = arith.constant 566 : index
    %122 = vector.load %arg7[%c0_82, %c566_83] : memref<4x896xf32, #tpu.memory_space<vmem>>, vector<4x16xf32>
    tpu.vector_store %arg7[%c0_82, %c566_83], %121 {strides = array<i32>} : memref<4x896xf32, #tpu.memory_space<vmem>>, vector<4x16xf32>,
    %123 = vector.extract_strided_slice %92 {offsets = [0, 240], sizes = [4, 16], strides = [1, 1]} : vector<4x256xf32> to vector<4x16xf32>
    %c0_84 = arith.constant 0 : index
    %c594_85 = arith.constant 594 : index
    %124 = vector.load %arg7[%c0_84, %c594_85] : memref<4x896xf32, #tpu.memory_space<vmem>>, vector<4x16xf32>
    tpu.vector_store %arg7[%c0_84, %c594_85], %123 {strides = array<i32>} : memref<4x896xf32, #tpu.memory_space<vmem>>, vector<4x16xf32>,
    %c0_86 = arith.constant 0 : index
    %c58 = arith.constant 58 : index
    %125 = vector.load %arg7[%c0_86, %c58] : memref<4x896xf32, #tpu.memory_space<vmem>>, vector<4x448xf32>
    %c0_87 = arith.constant 0 : index
    %c62 = arith.constant 62 : index
    %126 = vector.load %arg7[%c0_87, %c62] : memref<4x896xf32, #tpu.memory_space<vmem>>, vector<4x448xf32>
    %c0_88 = arith.constant 0 : index
    %c66 = arith.constant 66 : index
    %127 = vector.load %arg7[%c0_88, %c66] : memref<4x896xf32, #tpu.memory_space<vmem>>, vector<4x448xf32>
    %c0_89 = arith.constant 0 : index
    %c170 = arith.constant 170 : index
    %128 = vector.load %arg7[%c0_89, %c170] : memref<4x896xf32, #tpu.memory_space<vmem>>, vector<4x448xf32>
    %c0_90 = arith.constant 0 : index
    %c174_91 = arith.constant 174 : index
    %129 = vector.load %arg7[%c0_90, %c174_91] : memref<4x896xf32, #tpu.memory_space<vmem>>, vector<4x448xf32>
    %c0_92 = arith.constant 0 : index
    %c178 = arith.constant 178 : index
    %130 = vector.load %arg7[%c0_92, %c178] : memref<4x896xf32, #tpu.memory_space<vmem>>, vector<4x448xf32>
    %c0_93 = arith.constant 0 : index
    %c282 = arith.constant 282 : index
    %131 = vector.load %arg7[%c0_93, %c282] : memref<4x896xf32, #tpu.memory_space<vmem>>, vector<4x448xf32>
    %c0_94 = arith.constant 0 : index
    %c286_95 = arith.constant 286 : index
    %132 = vector.load %arg7[%c0_94, %c286_95] : memref<4x896xf32, #tpu.memory_space<vmem>>, vector<4x448xf32>
    %c0_96 = arith.constant 0 : index
    %c290 = arith.constant 290 : index
    %133 = vector.load %arg7[%c0_96, %c290] : memref<4x896xf32, #tpu.memory_space<vmem>>, vector<4x448xf32>
    %134 = tpu.concatenate %125, %126, %127, %128, %129, %130, %131, %132, %133 in 0 : vector<4x448xf32>, vector<4x448xf32>, vector<4x448xf32>, vector<4x448xf32>, vector<4x448xf32>, vector<4x448xf32>, vector<4x448xf32>, vector<4x448xf32>, vector<4x448xf32> -> vector<36x448xf32>
    %c1_97 = arith.constant 1 : index
    %c0_98 = arith.constant 0 : index
    %c0_99 = arith.constant 0 : index
    %135 = vector.load %arg4[%c1_97, %c0_98, %c0_99] : memref<3x4x36xf32, #tpu.memory_space<vmem>>, vector<1x4x36xf32>
    %136 = vector.shape_cast %135 : vector<1x4x36xf32> to vector<4x36xf32>
    %cst_100 = arith.constant dense<0.000000e+00> : vector<4x448xf32>
    %137 = tpu.matmul %136, %134, %cst_100 {dimension_numbers = #tpu.dot_dimension_numbers<[1], [0], [0], [1], [0, 0, 1, 1], [], []>} : vector<4x36xf32>, vector<36x448xf32>, vector<4x448xf32> -> vector<4x448xf32>
    %c1_101 = arith.constant 1 : index
    %c0_102 = arith.constant 0 : index
    %c0_103 = arith.constant 0 : index
    %138 = vector.load %arg5[%c1_101, %c0_102, %c0_103] : memref<3x4x1xf32, #tpu.memory_space<vmem>>, vector<1x4x1xf32>
    %139 = vector.shape_cast %138 : vector<1x4x1xf32> to vector<4x1xf32>
    %140 = vector.broadcast %139 : vector<4x1xf32> to vector<4x448xf32>
    %141 = arith.addf %137, %140 : vector<4x448xf32>
    %142 = vector.extract_strided_slice %141 {offsets = [0, 0], sizes = [4, 16], strides = [1, 1]} : vector<4x448xf32> to vector<4x16xf32>
    %143 = vector.extract_strided_slice %141 {offsets = [0, 28], sizes = [4, 16], strides = [1, 1]} : vector<4x448xf32> to vector<4x16xf32>
    %144 = vector.extract_strided_slice %141 {offsets = [0, 56], sizes = [4, 16], strides = [1, 1]} : vector<4x448xf32> to vector<4x16xf32>
    %145 = vector.extract_strided_slice %141 {offsets = [0, 84], sizes = [4, 16], strides = [1, 1]} : vector<4x448xf32> to vector<4x16xf32>
    %146 = vector.extract_strided_slice %141 {offsets = [0, 112], sizes = [4, 16], strides = [1, 1]} : vector<4x448xf32> to vector<4x16xf32>
    %147 = vector.extract_strided_slice %141 {offsets = [0, 140], sizes = [4, 16], strides = [1, 1]} : vector<4x448xf32> to vector<4x16xf32>
    %148 = vector.extract_strided_slice %141 {offsets = [0, 168], sizes = [4, 16], strides = [1, 1]} : vector<4x448xf32> to vector<4x16xf32>
    %149 = vector.extract_strided_slice %141 {offsets = [0, 196], sizes = [4, 16], strides = [1, 1]} : vector<4x448xf32> to vector<4x16xf32>
    %150 = vector.extract_strided_slice %141 {offsets = [0, 224], sizes = [4, 16], strides = [1, 1]} : vector<4x448xf32> to vector<4x16xf32>
    %151 = vector.extract_strided_slice %141 {offsets = [0, 252], sizes = [4, 16], strides = [1, 1]} : vector<4x448xf32> to vector<4x16xf32>
    %152 = vector.extract_strided_slice %141 {offsets = [0, 280], sizes = [4, 16], strides = [1, 1]} : vector<4x448xf32> to vector<4x16xf32>
    %153 = vector.extract_strided_slice %141 {offsets = [0, 308], sizes = [4, 16], strides = [1, 1]} : vector<4x448xf32> to vector<4x16xf32>
    %154 = vector.extract_strided_slice %141 {offsets = [0, 336], sizes = [4, 16], strides = [1, 1]} : vector<4x448xf32> to vector<4x16xf32>
    %155 = vector.extract_strided_slice %141 {offsets = [0, 364], sizes = [4, 16], strides = [1, 1]} : vector<4x448xf32> to vector<4x16xf32>
    %156 = vector.extract_strided_slice %141 {offsets = [0, 392], sizes = [4, 16], strides = [1, 1]} : vector<4x448xf32> to vector<4x16xf32>
    %157 = vector.extract_strided_slice %141 {offsets = [0, 420], sizes = [4, 16], strides = [1, 1]} : vector<4x448xf32> to vector<4x16xf32>
    %158 = tpu.concatenate %142, %143, %144, %145, %146, %147, %148, %149, %150, %151, %152, %153, %154, %155, %156, %157 in 1 : vector<4x16xf32>, vector<4x16xf32>, vector<4x16xf32>, vector<4x16xf32>, vector<4x16xf32>, vector<4x16xf32>, vector<4x16xf32>, vector<4x16xf32>, vector<4x16xf32>, vector<4x16xf32>, vector<4x16xf32>, vector<4x16xf32>, vector<4x16xf32>, vector<4x16xf32>, vector<4x16xf32>, vector<4x16xf32> -> vector<4x256xf32>
    %c0_104 = arith.constant 0 : index
    %c4 = arith.constant 4 : index
    %c0_105 = arith.constant 0 : index
    %159 = vector.load %arg6[%c0_104, %c4, %c0_105] : memref<1x12x256xf32, #tpu.memory_space<vmem>>, vector<1x4x256xf32>
    %160 = vector.shape_cast %159 : vector<1x4x256xf32> to vector<4x256xf32>
    %161 = vector.shape_cast %158 : vector<4x256xf32> to vector<1x4x256xf32>
    tpu.vector_store %arg6[%c0_104, %c4, %c0_105], %161 {strides = array<i32>} : memref<1x12x256xf32, #tpu.memory_space<vmem>>, vector<1x4x256xf32>,
    %c2 = arith.constant 2 : index
    %c0_106 = arith.constant 0 : index
    %c0_107 = arith.constant 0 : index
    %162 = vector.load %arg2[%c2, %c0_106, %c0_107] : memref<3x4x1xf32, #tpu.memory_space<vmem>>, vector<1x4x1xf32>
    %163 = vector.shape_cast %162 : vector<1x4x1xf32> to vector<4x1xf32>
    %164 = vector.broadcast %163 : vector<4x1xf32> to vector<4x256xf32>
    %165 = arith.mulf %3, %164 : vector<4x256xf32>
    %c2_108 = arith.constant 2 : index
    %c0_109 = arith.constant 0 : index
    %c0_110 = arith.constant 0 : index
    %166 = vector.load %arg3[%c2_108, %c0_109, %c0_110] : memref<3x4x1xf32, #tpu.memory_space<vmem>>, vector<1x4x1xf32>
    %167 = vector.shape_cast %166 : vector<1x4x1xf32> to vector<4x1xf32>
    %168 = vector.broadcast %167 : vector<4x1xf32> to vector<4x256xf32>
    %169 = arith.addf %165, %168 : vector<4x256xf32>
    %cst_111 = arith.constant 0.000000e+00 : f32
    %170 = vector.broadcast %cst_111 : f32 to vector<4x256xf32>
    %171 = arith.maximumf %169, %170 : vector<4x256xf32>
    %172 = vector.extract_strided_slice %171 {offsets = [0, 0], sizes = [4, 16], strides = [1, 1]} : vector<4x256xf32> to vector<4x16xf32>
    %c0_112 = arith.constant 0 : index
    %c174_113 = arith.constant 174 : index
    %173 = vector.load %arg7[%c0_112, %c174_113] : memref<4x896xf32, #tpu.memory_space<vmem>>, vector<4x16xf32>
    tpu.vector_store %arg7[%c0_112, %c174_113], %172 {strides = array<i32>} : memref<4x896xf32, #tpu.memory_space<vmem>>, vector<4x16xf32>,
    %174 = vector.extract_strided_slice %171 {offsets = [0, 16], sizes = [4, 16], strides = [1, 1]} : vector<4x256xf32> to vector<4x16xf32>
    %c0_114 = arith.constant 0 : index
    %c202_115 = arith.constant 202 : index
    %175 = vector.load %arg7[%c0_114, %c202_115] : memref<4x896xf32, #tpu.memory_space<vmem>>, vector<4x16xf32>
    tpu.vector_store %arg7[%c0_114, %c202_115], %174 {strides = array<i32>} : memref<4x896xf32, #tpu.memory_space<vmem>>, vector<4x16xf32>,
    %176 = vector.extract_strided_slice %171 {offsets = [0, 32], sizes = [4, 16], strides = [1, 1]} : vector<4x256xf32> to vector<4x16xf32>
    %c0_116 = arith.constant 0 : index
    %c230_117 = arith.constant 230 : index
    %177 = vector.load %arg7[%c0_116, %c230_117] : memref<4x896xf32, #tpu.memory_space<vmem>>, vector<4x16xf32>
    tpu.vector_store %arg7[%c0_116, %c230_117], %176 {strides = array<i32>} : memref<4x896xf32, #tpu.memory_space<vmem>>, vector<4x16xf32>,
    %178 = vector.extract_strided_slice %171 {offsets = [0, 48], sizes = [4, 16], strides = [1, 1]} : vector<4x256xf32> to vector<4x16xf32>
    %c0_118 = arith.constant 0 : index
    %c258_119 = arith.constant 258 : index
    %179 = vector.load %arg7[%c0_118, %c258_119] : memref<4x896xf32, #tpu.memory_space<vmem>>, vector<4x16xf32>
    tpu.vector_store %arg7[%c0_118, %c258_119], %178 {strides = array<i32>} : memref<4x896xf32, #tpu.memory_space<vmem>>, vector<4x16xf32>,
    %180 = vector.extract_strided_slice %171 {offsets = [0, 64], sizes = [4, 16], strides = [1, 1]} : vector<4x256xf32> to vector<4x16xf32>
    %c0_120 = arith.constant 0 : index
    %c286_121 = arith.constant 286 : index
    %181 = vector.load %arg7[%c0_120, %c286_121] : memref<4x896xf32, #tpu.memory_space<vmem>>, vector<4x16xf32>
    tpu.vector_store %arg7[%c0_120, %c286_121], %180 {strides = array<i32>} : memref<4x896xf32, #tpu.memory_space<vmem>>, vector<4x16xf32>,
    %182 = vector.extract_strided_slice %171 {offsets = [0, 80], sizes = [4, 16], strides = [1, 1]} : vector<4x256xf32> to vector<4x16xf32>
    %c0_122 = arith.constant 0 : index
    %c314_123 = arith.constant 314 : index
    %183 = vector.load %arg7[%c0_122, %c314_123] : memref<4x896xf32, #tpu.memory_space<vmem>>, vector<4x16xf32>
    tpu.vector_store %arg7[%c0_122, %c314_123], %182 {strides = array<i32>} : memref<4x896xf32, #tpu.memory_space<vmem>>, vector<4x16xf32>,
    %184 = vector.extract_strided_slice %171 {offsets = [0, 96], sizes = [4, 16], strides = [1, 1]} : vector<4x256xf32> to vector<4x16xf32>
    %c0_124 = arith.constant 0 : index
    %c342_125 = arith.constant 342 : index
    %185 = vector.load %arg7[%c0_124, %c342_125] : memref<4x896xf32, #tpu.memory_space<vmem>>, vector<4x16xf32>
    tpu.vector_store %arg7[%c0_124, %c342_125], %184 {strides = array<i32>} : memref<4x896xf32, #tpu.memory_space<vmem>>, vector<4x16xf32>,
    %186 = vector.extract_strided_slice %171 {offsets = [0, 112], sizes = [4, 16], strides = [1, 1]} : vector<4x256xf32> to vector<4x16xf32>
    %c0_126 = arith.constant 0 : index
    %c370_127 = arith.constant 370 : index
    %187 = vector.load %arg7[%c0_126, %c370_127] : memref<4x896xf32, #tpu.memory_space<vmem>>, vector<4x16xf32>
    tpu.vector_store %arg7[%c0_126, %c370_127], %186 {strides = array<i32>} : memref<4x896xf32, #tpu.memory_space<vmem>>, vector<4x16xf32>,
    %188 = vector.extract_strided_slice %171 {offsets = [0, 128], sizes = [4, 16], strides = [1, 1]} : vector<4x256xf32> to vector<4x16xf32>
    %c0_128 = arith.constant 0 : index
    %c398_129 = arith.constant 398 : index
    %189 = vector.load %arg7[%c0_128, %c398_129] : memref<4x896xf32, #tpu.memory_space<vmem>>, vector<4x16xf32>
    tpu.vector_store %arg7[%c0_128, %c398_129], %188 {strides = array<i32>} : memref<4x896xf32, #tpu.memory_space<vmem>>, vector<4x16xf32>,
    %190 = vector.extract_strided_slice %171 {offsets = [0, 144], sizes = [4, 16], strides = [1, 1]} : vector<4x256xf32> to vector<4x16xf32>
    %c0_130 = arith.constant 0 : index
    %c426_131 = arith.constant 426 : index
    %191 = vector.load %arg7[%c0_130, %c426_131] : memref<4x896xf32, #tpu.memory_space<vmem>>, vector<4x16xf32>
    tpu.vector_store %arg7[%c0_130, %c426_131], %190 {strides = array<i32>} : memref<4x896xf32, #tpu.memory_space<vmem>>, vector<4x16xf32>,
    %192 = vector.extract_strided_slice %171 {offsets = [0, 160], sizes = [4, 16], strides = [1, 1]} : vector<4x256xf32> to vector<4x16xf32>
    %c0_132 = arith.constant 0 : index
    %c454_133 = arith.constant 454 : index
    %193 = vector.load %arg7[%c0_132, %c454_133] : memref<4x896xf32, #tpu.memory_space<vmem>>, vector<4x16xf32>
    tpu.vector_store %arg7[%c0_132, %c454_133], %192 {strides = array<i32>} : memref<4x896xf32, #tpu.memory_space<vmem>>, vector<4x16xf32>,
    %194 = vector.extract_strided_slice %171 {offsets = [0, 176], sizes = [4, 16], strides = [1, 1]} : vector<4x256xf32> to vector<4x16xf32>
    %c0_134 = arith.constant 0 : index
    %c482_135 = arith.constant 482 : index
    %195 = vector.load %arg7[%c0_134, %c482_135] : memref<4x896xf32, #tpu.memory_space<vmem>>, vector<4x16xf32>
    tpu.vector_store %arg7[%c0_134, %c482_135], %194 {strides = array<i32>} : memref<4x896xf32, #tpu.memory_space<vmem>>, vector<4x16xf32>,
    %196 = vector.extract_strided_slice %171 {offsets = [0, 192], sizes = [4, 16], strides = [1, 1]} : vector<4x256xf32> to vector<4x16xf32>
    %c0_136 = arith.constant 0 : index
    %c510_137 = arith.constant 510 : index
    %197 = vector.load %arg7[%c0_136, %c510_137] : memref<4x896xf32, #tpu.memory_space<vmem>>, vector<4x16xf32>
    tpu.vector_store %arg7[%c0_136, %c510_137], %196 {strides = array<i32>} : memref<4x896xf32, #tpu.memory_space<vmem>>, vector<4x16xf32>,
    %198 = vector.extract_strided_slice %171 {offsets = [0, 208], sizes = [4, 16], strides = [1, 1]} : vector<4x256xf32> to vector<4x16xf32>
    %c0_138 = arith.constant 0 : index
    %c538_139 = arith.constant 538 : index
    %199 = vector.load %arg7[%c0_138, %c538_139] : memref<4x896xf32, #tpu.memory_space<vmem>>, vector<4x16xf32>
    tpu.vector_store %arg7[%c0_138, %c538_139], %198 {strides = array<i32>} : memref<4x896xf32, #tpu.memory_space<vmem>>, vector<4x16xf32>,
    %200 = vector.extract_strided_slice %171 {offsets = [0, 224], sizes = [4, 16], strides = [1, 1]} : vector<4x256xf32> to vector<4x16xf32>
    %c0_140 = arith.constant 0 : index
    %c566_141 = arith.constant 566 : index
    %201 = vector.load %arg7[%c0_140, %c566_141] : memref<4x896xf32, #tpu.memory_space<vmem>>, vector<4x16xf32>
    tpu.vector_store %arg7[%c0_140, %c566_141], %200 {strides = array<i32>} : memref<4x896xf32, #tpu.memory_space<vmem>>, vector<4x16xf32>,
    %202 = vector.extract_strided_slice %171 {offsets = [0, 240], sizes = [4, 16], strides = [1, 1]} : vector<4x256xf32> to vector<4x16xf32>
    %c0_142 = arith.constant 0 : index
    %c594_143 = arith.constant 594 : index
    %203 = vector.load %arg7[%c0_142, %c594_143] : memref<4x896xf32, #tpu.memory_space<vmem>>, vector<4x16xf32>
    tpu.vector_store %arg7[%c0_142, %c594_143], %202 {strides = array<i32>} : memref<4x896xf32, #tpu.memory_space<vmem>>, vector<4x16xf32>,
    %c0_144 = arith.constant 0 : index
    %c0_145 = arith.constant 0 : index
    %204 = vector.load %arg7[%c0_144, %c0_145] : memref<4x896xf32, #tpu.memory_space<vmem>>, vector<4x448xf32>
    %c0_146 = arith.constant 0 : index
    %c6 = arith.constant 6 : index
    %205 = vector.load %arg7[%c0_146, %c6] : memref<4x896xf32, #tpu.memory_space<vmem>>, vector<4x448xf32>
    %c0_147 = arith.constant 0 : index
    %c12 = arith.constant 12 : index
    %206 = vector.load %arg7[%c0_147, %c12] : memref<4x896xf32, #tpu.memory_space<vmem>>, vector<4x448xf32>
    %c0_148 = arith.constant 0 : index
    %c168 = arith.constant 168 : index
    %207 = vector.load %arg7[%c0_148, %c168] : memref<4x896xf32, #tpu.memory_space<vmem>>, vector<4x448xf32>
    %c0_149 = arith.constant 0 : index
    %c174_150 = arith.constant 174 : index
    %208 = vector.load %arg7[%c0_149, %c174_150] : memref<4x896xf32, #tpu.memory_space<vmem>>, vector<4x448xf32>
    %c0_151 = arith.constant 0 : index
    %c180 = arith.constant 180 : index
    %209 = vector.load %arg7[%c0_151, %c180] : memref<4x896xf32, #tpu.memory_space<vmem>>, vector<4x448xf32>
    %c0_152 = arith.constant 0 : index
    %c336 = arith.constant 336 : index
    %210 = vector.load %arg7[%c0_152, %c336] : memref<4x896xf32, #tpu.memory_space<vmem>>, vector<4x448xf32>
    %c0_153 = arith.constant 0 : index
    %c342_154 = arith.constant 342 : index
    %211 = vector.load %arg7[%c0_153, %c342_154] : memref<4x896xf32, #tpu.memory_space<vmem>>, vector<4x448xf32>
    %c0_155 = arith.constant 0 : index
    %c348 = arith.constant 348 : index
    %212 = vector.load %arg7[%c0_155, %c348] : memref<4x896xf32, #tpu.memory_space<vmem>>, vector<4x448xf32>
    %213 = tpu.concatenate %204, %205, %206, %207, %208, %209, %210, %211, %212 in 0 : vector<4x448xf32>, vector<4x448xf32>, vector<4x448xf32>, vector<4x448xf32>, vector<4x448xf32>, vector<4x448xf32>, vector<4x448xf32>, vector<4x448xf32>, vector<4x448xf32> -> vector<36x448xf32>
    %c2_156 = arith.constant 2 : index
    %c0_157 = arith.constant 0 : index
    %c0_158 = arith.constant 0 : index
    %214 = vector.load %arg4[%c2_156, %c0_157, %c0_158] : memref<3x4x36xf32, #tpu.memory_space<vmem>>, vector<1x4x36xf32>
    %215 = vector.shape_cast %214 : vector<1x4x36xf32> to vector<4x36xf32>
    %cst_159 = arith.constant dense<0.000000e+00> : vector<4x448xf32>
    %216 = tpu.matmul %215, %213, %cst_159 {dimension_numbers = #tpu.dot_dimension_numbers<[1], [0], [0], [1], [0, 0, 1, 1], [], []>} : vector<4x36xf32>, vector<36x448xf32>, vector<4x448xf32> -> vector<4x448xf32>
    %c2_160 = arith.constant 2 : index
    %c0_161 = arith.constant 0 : index
    %c0_162 = arith.constant 0 : index
    %217 = vector.load %arg5[%c2_160, %c0_161, %c0_162] : memref<3x4x1xf32, #tpu.memory_space<vmem>>, vector<1x4x1xf32>
    %218 = vector.shape_cast %217 : vector<1x4x1xf32> to vector<4x1xf32>
    %219 = vector.broadcast %218 : vector<4x1xf32> to vector<4x448xf32>
    %220 = arith.addf %216, %219 : vector<4x448xf32>
    %221 = vector.extract_strided_slice %220 {offsets = [0, 0], sizes = [4, 16], strides = [1, 1]} : vector<4x448xf32> to vector<4x16xf32>
    %222 = vector.extract_strided_slice %220 {offsets = [0, 28], sizes = [4, 16], strides = [1, 1]} : vector<4x448xf32> to vector<4x16xf32>
    %223 = vector.extract_strided_slice %220 {offsets = [0, 56], sizes = [4, 16], strides = [1, 1]} : vector<4x448xf32> to vector<4x16xf32>
    %224 = vector.extract_strided_slice %220 {offsets = [0, 84], sizes = [4, 16], strides = [1, 1]} : vector<4x448xf32> to vector<4x16xf32>
    %225 = vector.extract_strided_slice %220 {offsets = [0, 112], sizes = [4, 16], strides = [1, 1]} : vector<4x448xf32> to vector<4x16xf32>
    %226 = vector.extract_strided_slice %220 {offsets = [0, 140], sizes = [4, 16], strides = [1, 1]} : vector<4x448xf32> to vector<4x16xf32>
    %227 = vector.extract_strided_slice %220 {offsets = [0, 168], sizes = [4, 16], strides = [1, 1]} : vector<4x448xf32> to vector<4x16xf32>
    %228 = vector.extract_strided_slice %220 {offsets = [0, 196], sizes = [4, 16], strides = [1, 1]} : vector<4x448xf32> to vector<4x16xf32>
    %229 = vector.extract_strided_slice %220 {offsets = [0, 224], sizes = [4, 16], strides = [1, 1]} : vector<4x448xf32> to vector<4x16xf32>
    %230 = vector.extract_strided_slice %220 {offsets = [0, 252], sizes = [4, 16], strides = [1, 1]} : vector<4x448xf32> to vector<4x16xf32>
    %231 = vector.extract_strided_slice %220 {offsets = [0, 280], sizes = [4, 16], strides = [1, 1]} : vector<4x448xf32> to vector<4x16xf32>
    %232 = vector.extract_strided_slice %220 {offsets = [0, 308], sizes = [4, 16], strides = [1, 1]} : vector<4x448xf32> to vector<4x16xf32>
    %233 = vector.extract_strided_slice %220 {offsets = [0, 336], sizes = [4, 16], strides = [1, 1]} : vector<4x448xf32> to vector<4x16xf32>
    %234 = vector.extract_strided_slice %220 {offsets = [0, 364], sizes = [4, 16], strides = [1, 1]} : vector<4x448xf32> to vector<4x16xf32>
    %235 = vector.extract_strided_slice %220 {offsets = [0, 392], sizes = [4, 16], strides = [1, 1]} : vector<4x448xf32> to vector<4x16xf32>
    %236 = vector.extract_strided_slice %220 {offsets = [0, 420], sizes = [4, 16], strides = [1, 1]} : vector<4x448xf32> to vector<4x16xf32>
    %237 = tpu.concatenate %221, %222, %223, %224, %225, %226, %227, %228, %229, %230, %231, %232, %233, %234, %235, %236 in 1 : vector<4x16xf32>, vector<4x16xf32>, vector<4x16xf32>, vector<4x16xf32>, vector<4x16xf32>, vector<4x16xf32>, vector<4x16xf32>, vector<4x16xf32>, vector<4x16xf32>, vector<4x16xf32>, vector<4x16xf32>, vector<4x16xf32>, vector<4x16xf32>, vector<4x16xf32>, vector<4x16xf32>, vector<4x16xf32> -> vector<4x256xf32>
    %c0_163 = arith.constant 0 : index
    %c8 = arith.constant 8 : index
    %c0_164 = arith.constant 0 : index
    %238 = vector.load %arg6[%c0_163, %c8, %c0_164] : memref<1x12x256xf32, #tpu.memory_space<vmem>>, vector<1x4x256xf32>
    %239 = vector.shape_cast %238 : vector<1x4x256xf32> to vector<4x256xf32>
    %240 = vector.shape_cast %237 : vector<4x256xf32> to vector<1x4x256xf32>
    tpu.vector_store %arg6[%c0_163, %c8, %c0_164], %240 {strides = array<i32>} : memref<1x12x256xf32, #tpu.memory_space<vmem>>, vector<1x4x256xf32>,
    return
  }
  func.func @transform_0(%arg0: i32) -> (i32, i32, i32) {
    %c0_i32 = arith.constant 0 : i32
    %c0_i32_0 = arith.constant 0 : i32
    %c0_i32_1 = arith.constant 0 : i32
    return %arg0, %c0_i32, %c0_i32_0 : i32, i32, i32
  }
  func.func @transform_1(%arg0: i32) -> (i32, i32, i32) {
    %c0_i32 = arith.constant 0 : i32
    %c0_i32_0 = arith.constant 0 : i32
    %c0_i32_1 = arith.constant 0 : i32
    %c0_i32_2 = arith.constant 0 : i32
    return %c0_i32, %c0_i32_0, %c0_i32_1 : i32, i32, i32
  }
  func.func @transform_2(%arg0: i32) -> (i32, i32, i32) {
    %c0_i32 = arith.constant 0 : i32
    %c0_i32_0 = arith.constant 0 : i32
    %c0_i32_1 = arith.constant 0 : i32
    %c0_i32_2 = arith.constant 0 : i32
    return %c0_i32, %c0_i32_0, %c0_i32_1 : i32, i32, i32
  }
  func.func @transform_3(%arg0: i32) -> (i32, i32, i32) {
    %c0_i32 = arith.constant 0 : i32
    %c0_i32_0 = arith.constant 0 : i32
    %c0_i32_1 = arith.constant 0 : i32
    %c0_i32_2 = arith.constant 0 : i32
    return %c0_i32, %c0_i32_0, %c0_i32_1 : i32, i32, i32
  }
  func.func @transform_4(%arg0: i32) -> (i32, i32, i32) {
    %c0_i32 = arith.constant 0 : i32
    %c0_i32_0 = arith.constant 0 : i32
    %c0_i32_1 = arith.constant 0 : i32
    %c0_i32_2 = arith.constant 0 : i32
    return %c0_i32, %c0_i32_0, %c0_i32_1 : i32, i32, i32
  }
  func.func @transform_5(%arg0: i32) -> (i32, i32, i32) {
    %c0_i32 = arith.constant 0 : i32
    %c0_i32_0 = arith.constant 0 : i32
    %c0_i32_1 = arith.constant 0 : i32
    return %arg0, %c0_i32, %c0_i32_0 : i32, i32, i32
  }
}

</mosaic_0001>

<llo_original>
// kernel: tpu_custom_call.1
$region0: #{tpu_custom_call.1}
  #allocation0 [shape = 'u32[]', space=smem, size = 0x4, offset = 0x4, fixed_abs, tag = 'smem constant byte address 0x4 - core index']
  #allocation1 [shape = 'u32[72,128]{1,0:T(1,128)}', space=vmem, size = 0x9000, scoped, tag = 'internal scratch']
  #allocation2 [shape = 'f32[4,896]{1,0:T(4,128)}', space=vmem, size = 0x3800, scoped, tag = 'scratch operand']
  %s0 = inlined_call_operand.vmem [shape: f32[2,4,256], index: 0, kind: input, shape index: {}]
  %s1 = inlined_call_operand.vmem [shape: f32[3,4,1], index: 1, kind: input, shape index: {}]
  %s2 = inlined_call_operand.vmem [shape: f32[3,4,1], index: 2, kind: input, shape index: {}]
  %s3 = inlined_call_operand.vmem [shape: f32[3,4,36], index: 3, kind: input, shape index: {}]
  %s4 = inlined_call_operand.vmem [shape: f32[3,4,1], index: 4, kind: input, shape index: {}]
  %s5 = inlined_call_operand.vmem [shape: f32[2,12,256], index: 5, kind: output, shape index: {}]
  %s6 = sld [smem:[#allocation0]]
  $region53: #{tpu_custom_call.1} parent=0
    _
  %s8 = ssub.s32 1, %s6
  %s9 = scalar_select 0, %s8, %s6
  loop: start=0, step=1, limit=4
  $region2: #{tpu_custom_call.1} parent=0 // loop_pre_header
    _
  $region3: #{tpu_custom_call.1} parent=0 // loop_header
    %s11 = sphi 0, %s15
    %p12 = scmp.ge.s32.totalorder %s11, 4
    %s21 = sphi 0, %s23
    %s24 = sphi 0, %s21
    %s25 = sphi 0, %s24
    %s41 = sphi 0, %s25
    %s45 = sphi 0, %s45
    %s47 = sphi 0, %s45
    %s48 = sphi 0, %s47
    %s62 = sphi 0, %s48
    %s66 = sphi 0, %s66
    %s68 = sphi 0, %s66
    %s69 = sphi 0, %s68
    %s83 = sphi 0, %s69
    %s87 = sphi 0, %s87
    %s89 = sphi 0, %s87
    %s90 = sphi 0, %s89
    %s104 = sphi 0, %s90
    %s108 = sphi 0, %s108
    %s110 = sphi 0, %s108
    %s111 = sphi 0, %s110
    %s125 = sphi 0, %s111
    %s131 = sphi 0, %s133
    %s134 = sphi 0, %s131
    %s135 = sphi 0, %s134
    %s151 = sphi 0, %s135
  $region4: #{tpu_custom_call.1} parent=0 // loop_header_branch
    %14 = sbr.rel (%p12) target = $region8
  $region5: #{tpu_custom_call.1} parent=0 // loop_body
    %s16 = ssub.s32 %s11, 1
    %s17 = ssub.s32 %s11, 2
    %s18 = sadd.s32 %s11, 1
    %s19 = ssub.s32 %s11, %s18
    %p20 = scmp.eq.s32.totalorder %s19, 0
    %s22 = sadd.s32 %s21, 1
    %s23 = scalar_select %p20, %s21, %s22
    %p26 = pneg %p20
    %p27 = scmp.eq.s32.totalorder %s11, 1
    %p28 = por %p26, %p27
    %p29 = scmp.ne.s32.totalorder %s21, %s24
    %p30 = scmp.eq.s32.totalorder %s11, 0
    %p31 = por %p29, %p30
    %p32 = scmp.ne.s32.totalorder %s21, %s24
    %p33 = scmp.eq.s32.totalorder %s16, 1
    %p34 = por %p32, %p33
    %p35 = scmp.ne.s32.totalorder %s24, %s25
    %p36 = scmp.eq.s32.totalorder %s16, 0
    %p37 = por %p35, %p36
    %p38 = scmp.ne.s32.totalorder %s24, %s25
    %p39 = scmp.eq.s32.totalorder %s17, 1
    %p40 = por %p38, %p39
    %p42 = scmp.ne.s32.totalorder %s25, %s41
    %p43 = scmp.eq.s32.totalorder %s17, 0
    %p44 = por %p42, %p43
    %s46 = sadd.s32 %s45, 1
    %p49 = scmp.eq.s32.totalorder %s11, 1
    %p50 = scmp.ne.s32.totalorder %s45, %s47
    %p51 = scmp.eq.s32.totalorder %s11, 0
    %p52 = por %p50, %p51
    %p53 = scmp.ne.s32.totalorder %s45, %s47
    %p54 = scmp.eq.s32.totalorder %s16, 1
    %p55 = por %p53, %p54
    %p56 = scmp.ne.s32.totalorder %s47, %s48
    %p57 = scmp.eq.s32.totalorder %s16, 0
    %p58 = por %p56, %p57
    %p59 = scmp.ne.s32.totalorder %s47, %s48
    %p60 = scmp.eq.s32.totalorder %s17, 1
    %p61 = por %p59, %p60
    %p63 = scmp.ne.s32.totalorder %s48, %s62
    %p64 = scmp.eq.s32.totalorder %s17, 0
    %p65 = por %p63, %p64
    %s67 = sadd.s32 %s66, 1
    %p70 = scmp.eq.s32.totalorder %s11, 1
    %p71 = scmp.ne.s32.totalorder %s66, %s68
    %p72 = scmp.eq.s32.totalorder %s11, 0
    %p73 = por %p71, %p72
    %p74 = scmp.ne.s32.totalorder %s66, %s68
    %p75 = scmp.eq.s32.totalorder %s16, 1
    %p76 = por %p74, %p75
    %p77 = scmp.ne.s32.totalorder %s68, %s69
    %p78 = scmp.eq.s32.totalorder %s16, 0
    %p79 = por %p77, %p78
    %p80 = scmp.ne.s32.totalorder %s68, %s69
    %p81 = scmp.eq.s32.totalorder %s17, 1
    %p82 = por %p80, %p81
    %p84 = scmp.ne.s32.totalorder %s69, %s83
    %p85 = scmp.eq.s32.totalorder %s17, 0
    %p86 = por %p84, %p85
    %s88 = sadd.s32 %s87, 1
    %p91 = scmp.eq.s32.totalorder %s11, 1
    %p92 = scmp.ne.s32.totalorder %s87, %s89
    %p93 = scmp.eq.s32.totalorder %s11, 0
    %p94 = por %p92, %p93
    %p95 = scmp.ne.s32.totalorder %s87, %s89
    %p96 = scmp.eq.s32.totalorder %s16, 1
    %p97 = por %p95, %p96
    %p98 = scmp.ne.s32.totalorder %s89, %s90
    %p99 = scmp.eq.s32.totalorder %s16, 0
    %p100 = por %p98, %p99
    %p101 = scmp.ne.s32.totalorder %s89, %s90
    %p102 = scmp.eq.s32.totalorder %s17, 1
    %p103 = por %p101, %p102
    %p105 = scmp.ne.s32.totalorder %s90, %s104
    %p106 = scmp.eq.s32.totalorder %s17, 0
    %p107 = por %p105, %p106
    %s109 = sadd.s32 %s108, 1
    %p112 = scmp.eq.s32.totalorder %s11, 1
    %p113 = scmp.ne.s32.totalorder %s108, %s110
    %p114 = scmp.eq.s32.totalorder %s11, 0
    %p115 = por %p113, %p114
    %p116 = scmp.ne.s32.totalorder %s108, %s110
    %p117 = scmp.eq.s32.totalorder %s16, 1
    %p118 = por %p116, %p117
    %p119 = scmp.ne.s32.totalorder %s110, %s111
    %p120 = scmp.eq.s32.totalorder %s16, 0
    %p121 = por %p119, %p120
    %p122 = scmp.ne.s32.totalorder %s110, %s111
    %p123 = scmp.eq.s32.totalorder %s17, 1
    %p124 = por %p122, %p123
    %p126 = scmp.ne.s32.totalorder %s111, %s125
    %p127 = scmp.eq.s32.totalorder %s17, 0
    %p128 = por %p126, %p127
    %s129 = ssub.s32 %s11, %s18
    %p130 = scmp.eq.s32.totalorder %s129, 0
    %s132 = sadd.s32 %s131, 1
    %s133 = scalar_select %p130, %s131, %s132
    %p136 = pneg %p130
    %p137 = scmp.eq.s32.totalorder %s11, 1
    %p138 = por %p136, %p137
    %p139 = scmp.ne.s32.totalorder %s131, %s134
    %p140 = scmp.eq.s32.totalorder %s11, 0
    %p141 = por %p139, %p140
    %p142 = scmp.ne.s32.totalorder %s131, %s134
    %p143 = scmp.eq.s32.totalorder %s16, 1
    %p144 = por %p142, %p143
    %p145 = scmp.ne.s32.totalorder %s134, %s135
    %p146 = scmp.eq.s32.totalorder %s16, 0
    %p147 = por %p145, %p146
    %p148 = scmp.ne.s32.totalorder %s134, %s135
    %p149 = scmp.eq.s32.totalorder %s17, 1
    %p150 = por %p148, %p149
    %p152 = scmp.ne.s32.totalorder %s135, %s151
    %p153 = scmp.eq.s32.totalorder %s17, 0
    %p154 = por %p152, %p153
    %p155 = scmp.le.s32.totalorder 1, %s11
    %p156 = scmp.lt.s32.totalorder %s11, 3
    %p157 = pnand %p155, %p156
    %p158 = pneg %p157
    // Predicated region
    $region9: #{tpu_custom_call.1} parent=5 // pred_check
      _
    $region10: #{tpu_custom_call.1} parent=5 // pred_check_branch
      %160 = sbr.rel (%p157) target = $region12
    $region11: #{tpu_custom_call.1} parent=5 // pred_region
      %s161 = ssub.s32 %s11, 1
      // Predicated region
      $region13: #{tpu_custom_call.1} parent=11 // pred_check
        %p162 = pneg %p58
      $region14: #{tpu_custom_call.1} parent=11 // pred_check_branch
        %164 = sbr.rel (%p162) target = $region16
      $region15: #{tpu_custom_call.1} parent=11 // pred_region
        _
      $region16: #{tpu_custom_call.1} parent=11 // pred_fallthru
        _
      // Predicated region
      $region17: #{tpu_custom_call.1} parent=11 // pred_check
        %p165 = pneg %p79
      $region18: #{tpu_custom_call.1} parent=11 // pred_check_branch
        %167 = sbr.rel (%p165) target = $region20
      $region19: #{tpu_custom_call.1} parent=11 // pred_region
        _
      $region20: #{tpu_custom_call.1} parent=11 // pred_fallthru
        _
      // Predicated region
      $region21: #{tpu_custom_call.1} parent=11 // pred_check
        %p168 = pneg %p100
      $region22: #{tpu_custom_call.1} parent=11 // pred_check_branch
        %170 = sbr.rel (%p168) target = $region24
      $region23: #{tpu_custom_call.1} parent=11 // pred_region
        _
      $region24: #{tpu_custom_call.1} parent=11 // pred_fallthru
        _
      // Predicated region
      $region25: #{tpu_custom_call.1} parent=11 // pred_check
        %p171 = pneg %p121
      $region26: #{tpu_custom_call.1} parent=11 // pred_check_branch
        %173 = sbr.rel (%p171) target = $region28
      $region27: #{tpu_custom_call.1} parent=11 // pred_region
        _
      $region28: #{tpu_custom_call.1} parent=11 // pred_fallthru
        _
    $region12: #{tpu_custom_call.1} parent=5 // pred_fallthru
      _
    %p174 = scmp.lt.s32.totalorder %s11, 2
    // Predicated region
    $region29: #{tpu_custom_call.1} parent=5 // pred_check
      %p175 = pneg %p174
    $region30: #{tpu_custom_call.1} parent=5 // pred_check_branch
      %177 = sbr.rel (%p175) target = $region32
    $region31: #{tpu_custom_call.1} parent=5 // pred_region
      // Predicated region
      $region33: #{tpu_custom_call.1} parent=31 // pred_check
        %p178 = pneg %p31
      $region34: #{tpu_custom_call.1} parent=31 // pred_check_branch
        %180 = sbr.rel (%p178) target = $region36
      $region35: #{tpu_custom_call.1} parent=31 // pred_region
        %p181 = scmp.lt.s32.totalorder %s11, 1
        %s182 = scalar_select %p181, %s11, 1
        %s183 = smul.addr %s182, 2
        %s184 = smul.addr %s183, 4
        %s185 = scalar_lea.vmem %s0, %s184
      $region36: #{tpu_custom_call.1} parent=31 // pred_fallthru
        _
    $region32: #{tpu_custom_call.1} parent=5 // pred_fallthru
      _
    %p186 = scmp.le.s32.totalorder 1, %s11
    %p187 = scmp.lt.s32.totalorder %s11, 3
    %p188 = pnand %p186, %p187
    %p189 = pneg %p188
    // Predicated region
    $region37: #{tpu_custom_call.1} parent=5 // pred_check
      _
    $region38: #{tpu_custom_call.1} parent=5 // pred_check_branch
      %191 = sbr.rel (%p188) target = $region40
    $region39: #{tpu_custom_call.1} parent=5 // pred_region
      %s192 = ssub.s32 %s11, 1
      %p193 = scmp.lt.s32.totalorder %s16, 1
      %s194 = scalar_select %p193, %s16, 1
      %s195 = smul.addr %s194, 2
      %s196 = smul.addr %s195, 4
      %s197 = scalar_lea.vmem %s0, %s196
      %p198 = pneg %p37
      %p199 = pneg %p34
      %p200 = pneg %p58
      %p201 = pneg %p55
      %p202 = pneg %p79
      %p203 = pneg %p76
      %p204 = pneg %p100
      %p205 = pneg %p97
      %p206 = pneg %p121
      %p207 = pneg %p118
      %p208 = pneg %p147
      %p209 = pneg %p144
      %p210 = scmp.lt.s32.totalorder %s16, 1
      %s211 = scalar_select %p210, %s16, 1
      %s212 = smul.addr %s211, 4
      %s213 = smul.addr %s212, 8
      %s214 = scalar_lea.vmem %s5, %s213
      %p215 = scmp.lt.s32.totalorder %s16, 1
      %s216 = scalar_select %p215, %s16, 1
      %s217 = smul.addr %s216, 2
      %s218 = smul.addr %s217, 4
      %s219 = scalar_lea.vmem %s0, %s218
      %p220 = scmp.lt.s32.totalorder %s16, 1
      %s221 = scalar_select %p220, %s16, 1
      %s222 = smul.addr %s221, 4
      %s223 = smul.addr %s222, 8
      %s224 = scalar_lea.vmem %s5, %s223
      %225 = vst [vmem:[#allocation2] sm:$0xff] 0.0
      %226 = vst [vmem:[#allocation2 + $0x8] sm:$0xff] 0.0
      %227 = vst [vmem:[#allocation2 + $0x10] sm:$0xff] 0.0
      %228 = vst [vmem:[#allocation2 + $0x18] sm:$0xf] 0.0
      %v229 = vld [vmem:[%s219] sm:$0xff]
      %v230 = vld [vmem:[%s1] sm:$0xf]
      %232 = vset.pattern.permute.xlu0 0
      %233 = vperm.xlu0 %232, %v230
      %v234 = vpop.permute.xlu0 %233
      %v236 = vunpack.c.l.s4 839922192
      %v237 = vunpack.c.0.s8 %v236
      %v238 = vperm.slane %v234, %v237
      %v240 = vmul.f32 %v229, %v238
      %v241 = vld [vmem:[%s2] sm:$0xf]
      %243 = vset.pattern.permute.xlu0 0
      %244 = vperm.xlu0 %243, %v241
      %v245 = vpop.permute.xlu0 %244
      %v247 = vunpack.c.l.s4 839922192
      %v248 = vunpack.c.0.s8 %v247
      %v249 = vperm.slane %v245, %v248
      %v251 = vadd.f32 %v240, %v249
      %v252 = vmax.f32 %v251, 0.0
      %254 = vrot.lane.b32.xlu0 %v252, 46
      %v255 = vpop.permute.xlu0 %254
      %vm257 = vcmask 503152
      %258 = vst.msk [vmem:[#allocation2 + $0x4] sm:$0xf] %vm257, %v255
      %259 = vrot.lane.b32.xlu0 %v252, 58
      %v260 = vpop.permute.xlu0 %259
      %vm262 = vcmask 732752
      %263 = vst.msk [vmem:[#allocation2 + $0x4] sm:$0xf] %vm262, %v260
      %264 = vrot.lane.b32.xlu0 %v252, 70
      %v265 = vpop.permute.xlu0 %264
      %vm267 = vcmask 962352
      %268 = vst.msk [vmem:[#allocation2 + $0x4] sm:$0xf] %vm267, %v265
      %269 = vrot.lane.b32.xlu0 %v252, 82
      %v270 = vpop.permute.xlu0 %269
      %vm272 = vcmask 142352
      %273 = vst.msk [vmem:[#allocation2 + $0x8] sm:$0xf] %vm272, %v270
      %274 = vrot.lane.b32.xlu0 %v252, 94
      %v275 = vpop.permute.xlu0 %274
      %vm277 = vcmask 371952
      %278 = vst.msk [vmem:[#allocation2 + $0x8] sm:$0xf] %vm277, %v275
      %279 = vrot.lane.b32.xlu0 %v252, 106
      %v280 = vpop.permute.xlu0 %279
      %vm282 = vcmask 601552
      %283 = vst.msk [vmem:[#allocation2 + $0x8] sm:$0xf] %vm282, %v280
      %284 = vrot.lane.b32.xlu0 %v252, 118
      %v285 = vpop.permute.xlu0 %284
      %vm287 = vcmask 831152
      %288 = vst.msk [vmem:[#allocation2 + $0x8] sm:$0xf] %vm287, %v285
      %289 = vrot.lane.b32.xlu0 %v252, 2
      %v290 = vpop.permute.xlu0 %289
      %v291 = vrot.slane %v290, 4
      %vm292 = vcmask 15360
      %v293 = vsel %vm292, %v291, %v290
      %vm295 = vcmask 1044368
      %vm296 = vcmask 15364
      %vm297 = vmor %vm296, %vm295
      %298 = vst.msk [vmem:[#allocation2 + $0x8] sm:$0xff] %vm297, %v293
      %299 = vrot.lane.b32.xlu0 %v252, 14
      %v300 = vpop.permute.xlu0 %299
      %v301 = vrot.slane %v300, 4
      %vm302 = vcmask 113664
      %v303 = vsel %vm302, %v300, %v301
      %vm305 = vcmask 240752
      %306 = vst.msk [vmem:[#allocation2 + $0xc] sm:$0xf] %vm305, %v303
      %307 = vrot.lane.b32.xlu0 %v252, 26
      %v308 = vpop.permute.xlu0 %307
      %v309 = vrot.slane %v308, 4
      %vm310 = vcmask 211968
      %v311 = vsel %vm310, %v308, %v309
      %vm313 = vcmask 470352
      %314 = vst.msk [vmem:[#allocation2 + $0xc] sm:$0xf] %vm313, %v311
      %315 = vrot.lane.b32.xlu0 %v252, 38
      %v316 = vpop.permute.xlu0 %315
      %v317 = vrot.slane %v316, 4
      %vm318 = vcmask 310272
      %v319 = vsel %vm318, %v316, %v317
      %vm321 = vcmask 699952
      %322 = vst.msk [vmem:[#allocation2 + $0xc] sm:$0xf] %vm321, %v319
      %323 = vrot.lane.b32.xlu0 %v252, 50
      %v324 = vpop.permute.xlu0 %323
      %v325 = vrot.slane %v324, 4
      %vm326 = vcmask 408576
      %v327 = vsel %vm326, %v324, %v325
      %vm329 = vcmask 929552
      %330 = vst.msk [vmem:[#allocation2 + $0xc] sm:$0xf] %vm329, %v327
      %331 = vrot.lane.b32.xlu0 %v252, 62
      %v332 = vpop.permute.xlu0 %331
      %v333 = vrot.slane %v332, 4
      %vm334 = vcmask 506880
      %v335 = vsel %vm334, %v332, %v333
      %vm337 = vcmask 1044464
      %vm338 = vcmask 113668
      %vm339 = vmor %vm338, %vm337
      %340 = vst.msk [vmem:[#allocation2 + $0xc] sm:$0xff] %vm339, %v335
      %341 = vrot.lane.b32.xlu0 %v252, 74
      %v342 = vpop.permute.xlu0 %341
      %v343 = vrot.slane %v342, 4
      %vm345 = vcmask 339152
      %346 = vst.msk [vmem:[#allocation2 + $0x10] sm:$0xf] %vm345, %v343
      %347 = vrot.lane.b32.xlu0 %v252, 86
      %v348 = vpop.permute.xlu0 %347
      %v349 = vrot.slane %v348, 4
      %vm351 = vcmask 568752
      %352 = vst.msk [vmem:[#allocation2 + $0x10] sm:$0xf] %vm351, %v349
      %353 = vrot.lane.b32.xlu0 %v252, 98
      %v354 = vpop.permute.xlu0 %353
      %v355 = vrot.slane %v354, 4
      %vm357 = vcmask 798352
      %358 = vst.msk [vmem:[#allocation2 + $0x10] sm:$0xf] %vm357, %v355
      %v359 = vld [vmem:[#allocation2] sm:$0xff]
      %v360 = vld [vmem:[#allocation2 + $0x8] sm:$0xff]
      %v361 = vld [vmem:[#allocation2 + $0x10] sm:$0xf]
      %v362 = vld [vmem:[#allocation2 + $0x4] sm:$0xff]
      %v363 = vld [vmem:[#allocation2 + $0xc] sm:$0xff]
      %v364 = vld [vmem:[#allocation2 + $0x14] sm:$0xf]
      %368 = vst [vmem:[#allocation1] ss:$2 sm:$0xff] %v359
      %s369 = scalar_lea.vmem [#allocation1], 16
      %370 = vst [vmem:[%s369] ss:$2 sm:$0xff] %v360
      %s371 = scalar_lea.vmem [#allocation1], 32
      %372 = vst [vmem:[%s371] ss:$2 sm:$0xff] %v361
      %v373 = vld.sshfl [vmem:[#allocation1] sm:$0xff pattern:$0x75316420]
      %v374 = vld.sshfl [vmem:[#allocation1 + $0x8] sm:$0xff pattern:$0x75316420]
      %v375 = vld.sshfl [vmem:[#allocation1 + $0x10] sm:$0xff pattern:$0x75316420]
      %v376 = vld.sshfl [vmem:[#allocation1 + $0x18] sm:$0xff pattern:$0x75316420]
      %v377 = vld.sshfl [vmem:[#allocation1 + $0x20] sm:$0xff pattern:$0x75316420]
      %s383 = scalar_lea.vmem [#allocation1], 1
      %384 = vst [vmem:[%s383] ss:$2 sm:$0xff] %v359
      %s385 = scalar_lea.vmem [#allocation1], 17
      %386 = vst [vmem:[%s385] ss:$2 sm:$0xff] %v360
      %s387 = scalar_lea.vmem [#allocation1], 33
      %388 = vst [vmem:[%s387] ss:$2 sm:$0xff] %v361
      %v389 = vld.sshfl [vmem:[#allocation1] sm:$0xff pattern:$0x75316420]
      %v390 = vld.sshfl [vmem:[#allocation1 + $0x8] sm:$0xff pattern:$0x75316420]
      %v391 = vld.sshfl [vmem:[#allocation1 + $0x10] sm:$0xff pattern:$0x75316420]
      %v392 = vld.sshfl [vmem:[#allocation1 + $0x18] sm:$0xff pattern:$0x75316420]
      %v393 = vld.sshfl [vmem:[#allocation1 + $0x20] sm:$0xff pattern:$0x75316420]
      %394 = vrot.lane.b32.xlu0 %v389, 126
      %v395 = vpop.permute.xlu0 %394
      %396 = vrot.lane.b32.xlu0 %v390, 126
      %v397 = vpop.permute.xlu0 %396
      %398 = vrot.lane.b32.xlu0 %v391, 126
      %v399 = vpop.permute.xlu0 %398
      %400 = vrot.lane.b32.xlu0 %v392, 126
      %v401 = vpop.permute.xlu0 %400
      %402 = vrot.lane.b32.xlu0 %v393, 126
      %v403 = vpop.permute.xlu0 %402
      %vm404 = vcmask 1031168
      %v405 = vsel %vm404, %v395, %v397
      %v406 = vsel %vm404, %v397, %v399
      %v407 = vsel %vm404, %v399, %v401
      %v408 = vsel %vm404, %v401, %v403
      %414 = vst [vmem:[#allocation1] ss:$2 sm:$0xff] %v359
      %s415 = scalar_lea.vmem [#allocation1], 16
      %416 = vst [vmem:[%s415] ss:$2 sm:$0xff] %v360
      %s417 = scalar_lea.vmem [#allocation1], 32
      %418 = vst [vmem:[%s417] ss:$2 sm:$0xff] %v361
      %v419 = vld.sshfl [vmem:[#allocation1] sm:$0xff pattern:$0x75316420]
      %v420 = vld.sshfl [vmem:[#allocation1 + $0x8] sm:$0xff pattern:$0x75316420]
      %v421 = vld.sshfl [vmem:[#allocation1 + $0x10] sm:$0xff pattern:$0x75316420]
      %v422 = vld.sshfl [vmem:[#allocation1 + $0x18] sm:$0xff pattern:$0x75316420]
      %v423 = vld.sshfl [vmem:[#allocation1 + $0x20] sm:$0xff pattern:$0x75316420]
      %424 = vrot.lane.b32.xlu0 %v419, 124
      %v425 = vpop.permute.xlu0 %424
      %426 = vrot.lane.b32.xlu0 %v420, 124
      %v427 = vpop.permute.xlu0 %426
      %428 = vrot.lane.b32.xlu0 %v421, 124
      %v429 = vpop.permute.xlu0 %428
      %430 = vrot.lane.b32.xlu0 %v422, 124
      %v431 = vpop.permute.xlu0 %430
      %432 = vrot.lane.b32.xlu0 %v423, 124
      %v433 = vpop.permute.xlu0 %432
      %vm434 = vcmask 1014784
      %v435 = vsel %vm434, %v425, %v427
      %v436 = vsel %vm434, %v427, %v429
      %v437 = vsel %vm434, %v429, %v431
      %v438 = vsel %vm434, %v431, %v433
      %s446 = scalar_lea.vmem [#allocation1], 1
      %447 = vst [vmem:[%s446] ss:$2 sm:$0xff] %v362
      %s448 = scalar_lea.vmem [#allocation1], 17
      %449 = vst [vmem:[%s448] ss:$2 sm:$0xff] %v363
      %v450 = vld.sshfl [vmem:[#allocation1] sm:$0xff pattern:$0x75316420]
      %v451 = vld.sshfl [vmem:[#allocation1 + $0x8] sm:$0xff pattern:$0x75316420]
      %v452 = vld.sshfl [vmem:[#allocation1 + $0x10] sm:$0xff pattern:$0x75316420]
      %v453 = vld.sshfl [vmem:[#allocation1 + $0x18] sm:$0xff pattern:$0x75316420]
      %454 = vrot.lane.b32.xlu0 %v450, 72
      %v455 = vpop.permute.xlu0 %454
      %456 = vrot.lane.b32.xlu0 %v451, 72
      %v457 = vpop.permute.xlu0 %456
      %458 = vrot.lane.b32.xlu0 %v452, 72
      %v459 = vpop.permute.xlu0 %458
      %460 = vrot.lane.b32.xlu0 %v453, 72
      %v461 = vpop.permute.xlu0 %460
      %vm462 = vcmask 588800
      %v463 = vsel %vm462, %v455, %v457
      %v464 = vsel %vm462, %v457, %v459
      %v465 = vsel %vm462, %v459, %v461
      %471 = vst [vmem:[#allocation1] ss:$2 sm:$0xff] %v362
      %s472 = scalar_lea.vmem [#allocation1], 16
      %473 = vst [vmem:[%s472] ss:$2 sm:$0xff] %v363
      %v474 = vld.sshfl [vmem:[#allocation1] sm:$0xff pattern:$0x75316420]
      %v475 = vld.sshfl [vmem:[#allocation1 + $0x8] sm:$0xff pattern:$0x75316420]
      %v476 = vld.sshfl [vmem:[#allocation1 + $0x10] sm:$0xff pattern:$0x75316420]
      %v477 = vld.sshfl [vmem:[#allocation1 + $0x18] sm:$0xff pattern:$0x75316420]
      %478 = vrot.lane.b32.xlu0 %v474, 70
      %v479 = vpop.permute.xlu0 %478
      %480 = vrot.lane.b32.xlu0 %v475, 70
      %v481 = vpop.permute.xlu0 %480
      %482 = vrot.lane.b32.xlu0 %v476, 70
      %v483 = vpop.permute.xlu0 %482
      %484 = vrot.lane.b32.xlu0 %v477, 70
      %v485 = vpop.permute.xlu0 %484
      %vm486 = vcmask 572416
      %v487 = vsel %vm486, %v479, %v481
      %v488 = vsel %vm486, %v481, %v483
      %v489 = vsel %vm486, %v483, %v485
      %s495 = scalar_lea.vmem [#allocation1], 1
      %496 = vst [vmem:[%s495] ss:$2 sm:$0xff] %v362
      %s497 = scalar_lea.vmem [#allocation1], 17
      %498 = vst [vmem:[%s497] ss:$2 sm:$0xff] %v363
      %v499 = vld.sshfl [vmem:[#allocation1] sm:$0xff pattern:$0x75316420]
      %v500 = vld.sshfl [vmem:[#allocation1 + $0x8] sm:$0xff pattern:$0x75316420]
      %v501 = vld.sshfl [vmem:[#allocation1 + $0x10] sm:$0xff pattern:$0x75316420]
      %v502 = vld.sshfl [vmem:[#allocation1 + $0x18] sm:$0xff pattern:$0x75316420]
      %503 = vrot.lane.b32.xlu0 %v499, 68
      %v504 = vpop.permute.xlu0 %503
      %505 = vrot.lane.b32.xlu0 %v500, 68
      %v506 = vpop.permute.xlu0 %505
      %507 = vrot.lane.b32.xlu0 %v501, 68
      %v508 = vpop.permute.xlu0 %507
      %509 = vrot.lane.b32.xlu0 %v502, 68
      %v510 = vpop.permute.xlu0 %509
      %vm511 = vcmask 556032
      %v512 = vsel %vm511, %v504, %v506
      %v513 = vsel %vm511, %v506, %v508
      %v514 = vsel %vm511, %v508, %v510
      %521 = vst [vmem:[#allocation1] ss:$2 sm:$0xff] %v362
      %s522 = scalar_lea.vmem [#allocation1], 16
      %523 = vst [vmem:[%s522] ss:$2 sm:$0xff] %v363
      %s524 = scalar_lea.vmem [#allocation1], 32
      %525 = vst [vmem:[%s524] ss:$2 sm:$0xff] %v364
      %v526 = vld.sshfl [vmem:[#allocation1] sm:$0xff pattern:$0x75316420]
      %v527 = vld.sshfl [vmem:[#allocation1 + $0x8] sm:$0xff pattern:$0x75316420]
      %v528 = vld.sshfl [vmem:[#allocation1 + $0x10] sm:$0xff pattern:$0x75316420]
      %v529 = vld.sshfl [vmem:[#allocation1 + $0x18] sm:$0xff pattern:$0x75316420]
      %v530 = vld.sshfl [vmem:[#allocation1 + $0x20] sm:$0xff pattern:$0x75316420]
      %531 = vrot.lane.b32.xlu0 %v526, 16
      %v532 = vpop.permute.xlu0 %531
      %533 = vrot.lane.b32.xlu0 %v527, 16
      %v534 = vpop.permute.xlu0 %533
      %535 = vrot.lane.b32.xlu0 %v528, 16
      %v536 = vpop.permute.xlu0 %535
      %537 = vrot.lane.b32.xlu0 %v529, 16
      %v538 = vpop.permute.xlu0 %537
      %539 = vrot.lane.b32.xlu0 %v530, 16
      %v540 = vpop.permute.xlu0 %539
      %vm541 = vcmask 130048
      %v542 = vsel %vm541, %v532, %v534
      %v543 = vsel %vm541, %v534, %v536
      %v544 = vsel %vm541, %v536, %v538
      %v545 = vsel %vm541, %v538, %v540
      %s551 = scalar_lea.vmem [#allocation1], 1
      %552 = vst [vmem:[%s551] ss:$2 sm:$0xff] %v362
      %s553 = scalar_lea.vmem [#allocation1], 17
      %554 = vst [vmem:[%s553] ss:$2 sm:$0xff] %v363
      %s555 = scalar_lea.vmem [#allocation1], 33
      %556 = vst [vmem:[%s555] ss:$2 sm:$0xff] %v364
      %v557 = vld.sshfl [vmem:[#allocation1] sm:$0xff pattern:$0x75316420]
      %v558 = vld.sshfl [vmem:[#allocation1 + $0x8] sm:$0xff pattern:$0x75316420]
      %v559 = vld.sshfl [vmem:[#allocation1 + $0x10] sm:$0xff pattern:$0x75316420]
      %v560 = vld.sshfl [vmem:[#allocation1 + $0x18] sm:$0xff pattern:$0x75316420]
      %v561 = vld.sshfl [vmem:[#allocation1 + $0x20] sm:$0xff pattern:$0x75316420]
      %562 = vrot.lane.b32.xlu0 %v557, 14
      %v563 = vpop.permute.xlu0 %562
      %564 = vrot.lane.b32.xlu0 %v558, 14
      %v565 = vpop.permute.xlu0 %564
      %566 = vrot.lane.b32.xlu0 %v559, 14
      %v567 = vpop.permute.xlu0 %566
      %568 = vrot.lane.b32.xlu0 %v560, 14
      %v569 = vpop.permute.xlu0 %568
      %570 = vrot.lane.b32.xlu0 %v561, 14
      %v571 = vpop.permute.xlu0 %570
      %v572 = vsel %vm302, %v563, %v565
      %v573 = vsel %vm302, %v565, %v567
      %v574 = vsel %vm302, %v567, %v569
      %v575 = vsel %vm302, %v569, %v571
      %581 = vst [vmem:[#allocation1] ss:$2 sm:$0xff] %v362
      %s582 = scalar_lea.vmem [#allocation1], 16
      %583 = vst [vmem:[%s582] ss:$2 sm:$0xff] %v363
      %s584 = scalar_lea.vmem [#allocation1], 32
      %585 = vst [vmem:[%s584] ss:$2 sm:$0xff] %v364
      %v586 = vld.sshfl [vmem:[#allocation1] sm:$0xff pattern:$0x75316420]
      %v587 = vld.sshfl [vmem:[#allocation1 + $0x8] sm:$0xff pattern:$0x75316420]
      %v588 = vld.sshfl [vmem:[#allocation1 + $0x10] sm:$0xff pattern:$0x75316420]
      %v589 = vld.sshfl [vmem:[#allocation1 + $0x18] sm:$0xff pattern:$0x75316420]
      %v590 = vld.sshfl [vmem:[#allocation1 + $0x20] sm:$0xff pattern:$0x75316420]
      %591 = vrot.lane.b32.xlu0 %v586, 12
      %v592 = vpop.permute.xlu0 %591
      %593 = vrot.lane.b32.xlu0 %v587, 12
      %v594 = vpop.permute.xlu0 %593
      %595 = vrot.lane.b32.xlu0 %v588, 12
      %v596 = vpop.permute.xlu0 %595
      %597 = vrot.lane.b32.xlu0 %v589, 12
      %v598 = vpop.permute.xlu0 %597
      %599 = vrot.lane.b32.xlu0 %v590, 12
      %v600 = vpop.permute.xlu0 %599
      %vm601 = vcmask 97280
      %v602 = vsel %vm601, %v592, %v594
      %v603 = vsel %vm601, %v594, %v596
      %v604 = vsel %vm601, %v596, %v598
      %v605 = vsel %vm601, %v598, %v600
      %vm606 = vcmask 1043456
      %v607 = vsel %vm606, %v373, %v405
      %v608 = vsel %vm606, %v374, %v406
      %v609 = vsel %vm606, %v375, %v407
      %v610 = vsel %vm606, %v376, %v408
      %v611 = vsel %vm606, %v377, %v403
      %v612 = vsel %vm606, %v435, %v455
      %v613 = vsel %vm606, %v436, %v463
      %v614 = vsel %vm606, %v437, %v464
      %v615 = vsel %vm606, %v438, %v465
      %v616 = vsel %vm606, %v433, %v461
      %v617 = vsel %vm606, %v479, %v504
      %v618 = vsel %vm606, %v487, %v512
      %v619 = vsel %vm606, %v488, %v513
      %v620 = vsel %vm606, %v489, %v514
      %v621 = vsel %vm606, %v485, %v510
      %v622 = vsel %vm606, %v532, %v563
      %v623 = vsel %vm606, %v542, %v572
      %v624 = vsel %vm606, %v543, %v573
      %v625 = vsel %vm606, %v544, %v574
      %v626 = vsel %vm606, %v545, %v575
      %v627 = vld [vmem:[%s3] sm:$0xf]
      %v628 = vld [vmem:[%s4] sm:$0xf]
      %630 = vset.pattern.permute.xlu0 0
      %631 = vperm.xlu0 %630, %v628
      %v632 = vpop.permute.xlu0 %631
      %654 = vrot.lane.b32.xlu0 %v607, 12
      %v655 = vpop.permute.xlu0 %654
      %656 = vrot.lane.b32.xlu0 %v608, 12
      %v657 = vpop.permute.xlu0 %656
      %658 = vrot.lane.b32.xlu0 %v609, 12
      %v659 = vpop.permute.xlu0 %658
      %660 = vrot.lane.b32.xlu0 %v610, 12
      %v661 = vpop.permute.xlu0 %660
      %662 = vrot.lane.b32.xlu0 %v611, 12
      %v663 = vpop.permute.xlu0 %662
      %664 = vrot.lane.b32.xlu0 %v612, 12
      %v665 = vpop.permute.xlu0 %664
      %666 = vrot.lane.b32.xlu0 %v613, 12
      %v667 = vpop.permute.xlu0 %666
      %668 = vrot.lane.b32.xlu0 %v614, 12
      %v669 = vpop.permute.xlu0 %668
      %670 = vrot.lane.b32.xlu0 %v615, 12
      %v671 = vpop.permute.xlu0 %670
      %672 = vrot.lane.b32.xlu0 %v616, 12
      %v673 = vpop.permute.xlu0 %672
      %674 = vrot.lane.b32.xlu0 %v617, 12
      %v675 = vpop.permute.xlu0 %674
      %676 = vrot.lane.b32.xlu0 %v618, 12
      %v677 = vpop.permute.xlu0 %676
      %678 = vrot.lane.b32.xlu0 %v619, 12
      %v679 = vpop.permute.xlu0 %678
      %680 = vrot.lane.b32.xlu0 %v620, 12
      %v681 = vpop.permute.xlu0 %680
      %682 = vrot.lane.b32.xlu0 %v621, 12
      %v683 = vpop.permute.xlu0 %682
      %684 = vrot.lane.b32.xlu0 %v622, 12
      %v685 = vpop.permute.xlu0 %684
      %686 = vrot.lane.b32.xlu0 %v623, 12
      %v687 = vpop.permute.xlu0 %686
      %688 = vrot.lane.b32.xlu0 %v624, 12
      %v689 = vpop.permute.xlu0 %688
      %690 = vrot.lane.b32.xlu0 %v625, 12
      %v691 = vpop.permute.xlu0 %690
      %692 = vrot.lane.b32.xlu0 %v626, 12
      %v693 = vpop.permute.xlu0 %692
      %694 = vrot.lane.b32.xlu0 %v592, 12
      %v695 = vpop.permute.xlu0 %694
      %696 = vrot.lane.b32.xlu0 %v602, 12
      %v697 = vpop.permute.xlu0 %696
      %698 = vrot.lane.b32.xlu0 %v603, 12
      %v699 = vpop.permute.xlu0 %698
      %700 = vrot.lane.b32.xlu0 %v604, 12
      %v701 = vpop.permute.xlu0 %700
      %702 = vrot.lane.b32.xlu0 %v605, 12
      %v703 = vpop.permute.xlu0 %702
      %v704 = vsel %vm601, %v655, %v657
      %v705 = vsel %vm601, %v657, %v659
      %v706 = vsel %vm601, %v659, %v661
      %v707 = vsel %vm601, %v661, %v663
      %v708 = vsel %vm601, %v665, %v667
      %v709 = vsel %vm601, %v667, %v669
      %v710 = vsel %vm601, %v669, %v671
      %v711 = vsel %vm601, %v671, %v673
      %v712 = vsel %vm601, %v675, %v677
      %v713 = vsel %vm601, %v677, %v679
      %v714 = vsel %vm601, %v679, %v681
      %v715 = vsel %vm601, %v681, %v683
      %v716 = vsel %vm601, %v685, %v687
      %v717 = vsel %vm601, %v687, %v689
      %v718 = vsel %vm601, %v689, %v691
      %v719 = vsel %vm601, %v691, %v693
      %v720 = vsel %vm601, %v695, %v697
      %v721 = vsel %vm601, %v697, %v699
      %v722 = vsel %vm601, %v699, %v701
      %v723 = vsel %vm601, %v701, %v703
      %vm740 = vcmask 293888
      %v742 = vsel %vm740, %v627, 0
      %v744 = vsel %vm606, %v720, 0
      %v746 = vsel %vm606, %v721, 0
      %v748 = vsel %vm606, %v722, 0
      %v750 = vsel %vm606, %v723, 0
      %752 = vmatpush.msra.mxu0 0.0
      %753 = vmatpush.msra.mxu0 0.0
      %754 = vmatpush.msra.mxu0 0.0
      %755 = vmatpush.msra.mxu0 0.0
      %756 = vmatpush.msra.mxu0 0.0
      %757 = vmatpush.msra.mxu0 0.0
      %758 = vmatpush.msra.mxu0 0.0
      %759 = vmatpush.msra.mxu0 0.0
      %760 = vmatpush.msra.mxu0 0.0
      %761 = vmatpush.msra.mxu0 0.0
      %762 = vmatpush.msra.mxu0 0.0
      %763 = vmatpush.msra.mxu0 %v744
      %764 = vmatpush.msra.mxu0 %v716
      %765 = vmatpush.msra.mxu0 %v712
      %766 = vmatpush.msra.mxu0 %v708
      %767 = vmatpush.msra.mxu0 %v704
      %768 = vmatmul.f32.gmra.mxu0 %v742
      %v769 = vpop.f32.mrf.mxu0
      %v770 = vadd.f32 %v632, %v769
      %771 = vdwg.mxu0
      %772 = vmatpush.msra.mxu0 0.0
      %773 = vmatpush.msra.mxu0 0.0
      %774 = vmatpush.msra.mxu0 0.0
      %775 = vmatpush.msra.mxu0 0.0
      %776 = vmatpush.msra.mxu0 0.0
      %777 = vmatpush.msra.mxu0 0.0
      %778 = vmatpush.msra.mxu0 0.0
      %779 = vmatpush.msra.mxu0 0.0
      %780 = vmatpush.msra.mxu0 0.0
      %781 = vmatpush.msra.mxu0 0.0
      %782 = vmatpush.msra.mxu0 0.0
      %783 = vmatpush.msra.mxu0 %v746
      %784 = vmatpush.msra.mxu0 %v717
      %785 = vmatpush.msra.mxu0 %v713
      %786 = vmatpush.msra.mxu0 %v709
      %787 = vmatpush.msra.mxu0 %v705
      %788 = vmatmul.f32.gmra.mxu0 %v742
      %v789 = vpop.f32.mrf.mxu0
      %v790 = vadd.f32 %v632, %v789
      %791 = vdwg.mxu0
      %792 = vmatpush.msra.mxu0 0.0
      %793 = vmatpush.msra.mxu0 0.0
      %794 = vmatpush.msra.mxu0 0.0
      %795 = vmatpush.msra.mxu0 0.0
      %796 = vmatpush.msra.mxu0 0.0
      %797 = vmatpush.msra.mxu0 0.0
      %798 = vmatpush.msra.mxu0 0.0
      %799 = vmatpush.msra.mxu0 0.0
      %800 = vmatpush.msra.mxu0 0.0
      %801 = vmatpush.msra.mxu0 0.0
      %802 = vmatpush.msra.mxu0 0.0
      %803 = vmatpush.msra.mxu0 %v748
      %804 = vmatpush.msra.mxu0 %v718
      %805 = vmatpush.msra.mxu0 %v714
      %806 = vmatpush.msra.mxu0 %v710
      %807 = vmatpush.msra.mxu0 %v706
      %808 = vmatmul.f32.gmra.mxu0 %v742
      %v809 = vpop.f32.mrf.mxu0
      %v810 = vadd.f32 %v632, %v809
      %811 = vdwg.mxu0
      %812 = vmatpush.msra.mxu0 0.0
      %813 = vmatpush.msra.mxu0 0.0
      %814 = vmatpush.msra.mxu0 0.0
      %815 = vmatpush.msra.mxu0 0.0
      %816 = vmatpush.msra.mxu0 0.0
      %817 = vmatpush.msra.mxu0 0.0
      %818 = vmatpush.msra.mxu0 0.0
      %819 = vmatpush.msra.mxu0 0.0
      %820 = vmatpush.msra.mxu0 0.0
      %821 = vmatpush.msra.mxu0 0.0
      %822 = vmatpush.msra.mxu0 0.0
      %823 = vmatpush.msra.mxu0 %v750
      %824 = vmatpush.msra.mxu0 %v719
      %825 = vmatpush.msra.mxu0 %v715
      %826 = vmatpush.msra.mxu0 %v711
      %827 = vmatpush.msra.mxu0 %v707
      %828 = vmatmul.f32.gmra.mxu0 %v742
      %v829 = vpop.f32.mrf.mxu0
      %v830 = vadd.f32 %v632, %v829
      %831 = vdwg.mxu0
      %833 = vrot.lane.b32.xlu0 %v770, 116
      %v834 = vpop.permute.xlu0 %833
      %836 = vrot.lane.b32.xlu0 %v770, 104
      %v837 = vpop.permute.xlu0 %836
      %839 = vrot.lane.b32.xlu0 %v770, 92
      %v840 = vpop.permute.xlu0 %839
      %842 = vrot.lane.b32.xlu0 %v770, 80
      %v843 = vpop.permute.xlu0 %842
      %846 = vrot.lane.b32.xlu0 %v790, 68
      %v847 = vpop.permute.xlu0 %846
      %849 = vrot.lane.b32.xlu0 %v790, 56
      %v850 = vpop.permute.xlu0 %849
      %852 = vrot.lane.b32.xlu0 %v790, 44
      %v853 = vpop.permute.xlu0 %852
      %855 = vrot.lane.b32.xlu0 %v790, 32
      %v856 = vpop.permute.xlu0 %855
      %859 = vrot.lane.b32.xlu0 %v790, 20
      %v860 = vpop.permute.xlu0 %859
      %861 = vrot.lane.b32.xlu0 %v810, 20
      %v862 = vpop.permute.xlu0 %861
      %vm863 = vcmask 162816
      %v864 = vsel %vm863, %v860, %v862
      %866 = vrot.lane.b32.xlu0 %v810, 8
      %v867 = vpop.permute.xlu0 %866
      %869 = vrot.lane.b32.xlu0 %v810, 124
      %v870 = vpop.permute.xlu0 %869
      %872 = vrot.lane.b32.xlu0 %v810, 112
      %v873 = vpop.permute.xlu0 %872
      %875 = vrot.lane.b32.xlu0 %v810, 100
      %v876 = vpop.permute.xlu0 %875
      %879 = vrot.lane.b32.xlu0 %v830, 88
      %v880 = vpop.permute.xlu0 %879
      %882 = vrot.lane.b32.xlu0 %v830, 76
      %v883 = vpop.permute.xlu0 %882
      %v885 = vsel %vm541, %v770, %v834
      %vm886 = vcmask 261120
      %v887 = vsel %vm886, %v885, %v837
      %vm888 = vcmask 392192
      %v889 = vsel %vm888, %v887, %v840
      %vm890 = vcmask 523264
      %v891 = vsel %vm890, %v889, %v843
      %vm892 = vcmask 654336
      %v893 = vsel %vm892, %v891, %v847
      %vm894 = vcmask 785408
      %v895 = vsel %vm894, %v893, %v850
      %vm896 = vcmask 916480
      %v897 = vsel %vm896, %v895, %v853
      %v898 = vsel %vm541, %v856, %v864
      %v899 = vsel %vm886, %v898, %v867
      %v900 = vsel %vm888, %v899, %v870
      %v901 = vsel %vm890, %v900, %v873
      %v902 = vsel %vm892, %v901, %v876
      %v903 = vsel %vm894, %v902, %v880
      %v904 = vsel %vm896, %v903, %v883
      %905 = vst [vmem:[%s224] sm:$0xf] %v897
      %906 = vst [vmem:[%s224 + $0x8] sm:$0xf] %v904
      %s907 = scalar_lea.vmem %s1, 4
      %v908 = vld [vmem:[%s907] sm:$0xf]
      %910 = vset.pattern.permute.xlu0 0
      %911 = vperm.xlu0 %910, %v908
      %v912 = vpop.permute.xlu0 %911
      %v914 = vunpack.c.l.s4 839922192
      %v915 = vunpack.c.0.s8 %v914
      %v916 = vperm.slane %v912, %v915
      %v918 = vmul.f32 %v229, %v916
      %s919 = scalar_lea.vmem %s2, 4
      %v920 = vld [vmem:[%s919] sm:$0xf]
      %922 = vset.pattern.permute.xlu0 0
      %923 = vperm.xlu0 %922, %v920
      %v924 = vpop.permute.xlu0 %923
      %v926 = vunpack.c.l.s4 839922192
      %v927 = vunpack.c.0.s8 %v926
      %v928 = vperm.slane %v924, %v927
      %v930 = vadd.f32 %v918, %v928
      %v931 = vmax.f32 %v930, 0.0
      %933 = vrot.lane.b32.xlu0 %v931, 46
      %v934 = vpop.permute.xlu0 %933
      %936 = vst.msk [vmem:[#allocation2 + $0x4] sm:$0xf] %vm257, %v934
      %937 = vrot.lane.b32.xlu0 %v931, 58
      %v938 = vpop.permute.xlu0 %937
      %940 = vst.msk [vmem:[#allocation2 + $0x4] sm:$0xf] %vm262, %v938
      %941 = vrot.lane.b32.xlu0 %v931, 70
      %v942 = vpop.permute.xlu0 %941
      %944 = vst.msk [vmem:[#allocation2 + $0x4] sm:$0xf] %vm267, %v942
      %945 = vrot.lane.b32.xlu0 %v931, 82
      %v946 = vpop.permute.xlu0 %945
      %948 = vst.msk [vmem:[#allocation2 + $0x8] sm:$0xf] %vm272, %v946
      %949 = vrot.lane.b32.xlu0 %v931, 94
      %v950 = vpop.permute.xlu0 %949
      %952 = vst.msk [vmem:[#allocation2 + $0x8] sm:$0xf] %vm277, %v950
      %953 = vrot.lane.b32.xlu0 %v931, 106
      %v954 = vpop.permute.xlu0 %953
      %956 = vst.msk [vmem:[#allocation2 + $0x8] sm:$0xf] %vm282, %v954
      %957 = vrot.lane.b32.xlu0 %v931, 118
      %v958 = vpop.permute.xlu0 %957
      %960 = vst.msk [vmem:[#allocation2 + $0x8] sm:$0xf] %vm287, %v958
      %961 = vrot.lane.b32.xlu0 %v931, 2
      %v962 = vpop.permute.xlu0 %961
      %v963 = vrot.slane %v962, 4
      %v964 = vsel %vm292, %v963, %v962
      %966 = vst.msk [vmem:[#allocation2 + $0x8] sm:$0xff] %vm297, %v964
      %967 = vrot.lane.b32.xlu0 %v931, 14
      %v968 = vpop.permute.xlu0 %967
      %v969 = vrot.slane %v968, 4
      %v970 = vsel %vm302, %v968, %v969
      %972 = vst.msk [vmem:[#allocation2 + $0xc] sm:$0xf] %vm305, %v970
      %973 = vrot.lane.b32.xlu0 %v931, 26
      %v974 = vpop.permute.xlu0 %973
      %v975 = vrot.slane %v974, 4
      %v976 = vsel %vm310, %v974, %v975
      %978 = vst.msk [vmem:[#allocation2 + $0xc] sm:$0xf] %vm313, %v976
      %979 = vrot.lane.b32.xlu0 %v931, 38
      %v980 = vpop.permute.xlu0 %979
      %v981 = vrot.slane %v980, 4
      %v982 = vsel %vm318, %v980, %v981
      %984 = vst.msk [vmem:[#allocation2 + $0xc] sm:$0xf] %vm321, %v982
      %985 = vrot.lane.b32.xlu0 %v931, 50
      %v986 = vpop.permute.xlu0 %985
      %v987 = vrot.slane %v986, 4
      %v988 = vsel %vm326, %v986, %v987
      %990 = vst.msk [vmem:[#allocation2 + $0xc] sm:$0xf] %vm329, %v988
      %991 = vrot.lane.b32.xlu0 %v931, 62
      %v992 = vpop.permute.xlu0 %991
      %v993 = vrot.slane %v992, 4
      %v994 = vsel %vm334, %v992, %v993
      %996 = vst.msk [vmem:[#allocation2 + $0xc] sm:$0xff] %vm339, %v994
      %997 = vrot.lane.b32.xlu0 %v931, 74
      %v998 = vpop.permute.xlu0 %997
      %v999 = vrot.slane %v998, 4
      %1001 = vst.msk [vmem:[#allocation2 + $0x10] sm:$0xf] %vm345, %v999
      %1002 = vrot.lane.b32.xlu0 %v931, 86
      %v1003 = vpop.permute.xlu0 %1002
      %v1004 = vrot.slane %v1003, 4
      %1006 = vst.msk [vmem:[#allocation2 + $0x10] sm:$0xf] %vm351, %v1004
      %1007 = vrot.lane.b32.xlu0 %v931, 98
      %v1008 = vpop.permute.xlu0 %1007
      %v1009 = vrot.slane %v1008, 4
      %1011 = vst.msk [vmem:[#allocation2 + $0x10] sm:$0xf] %vm357, %v1009
      %v1012 = vld [vmem:[#allocation2] sm:$0xff]
      %v1013 = vld [vmem:[#allocation2 + $0x8] sm:$0xff]
      %v1014 = vld [vmem:[#allocation2 + $0x10] sm:$0xf]
      %v1015 = vld [vmem:[#allocation2 + $0x4] sm:$0xff]
      %v1016 = vld [vmem:[#allocation2 + $0xc] sm:$0xff]
      %v1017 = vld [vmem:[#allocation2 + $0x10] sm:$0xff]
      %1020 = vst [vmem:[#allocation1] ss:$2 sm:$0xff] %v1012
      %s1021 = scalar_lea.vmem [#allocation1], 16
      %1022 = vst [vmem:[%s1021] ss:$2 sm:$0xff] %v1013
      %v1023 = vld.sshfl [vmem:[#allocation1] sm:$0xff pattern:$0x75316420]
      %v1024 = vld.sshfl [vmem:[#allocation1 + $0x8] sm:$0xff pattern:$0x75316420]
      %v1025 = vld.sshfl [vmem:[#allocation1 + $0x10] sm:$0xff pattern:$0x75316420]
      %v1026 = vld.sshfl [vmem:[#allocation1 + $0x18] sm:$0xff pattern:$0x75316420]
      %s1031 = scalar_lea.vmem [#allocation1], 1
      %1032 = vst [vmem:[%s1031] ss:$2 sm:$0xff] %v1012
      %s1033 = scalar_lea.vmem [#allocation1], 17
      %1034 = vst [vmem:[%s1033] ss:$2 sm:$0xff] %v1013
      %v1035 = vld.sshfl [vmem:[#allocation1] sm:$0xff pattern:$0x75316420]
      %v1036 = vld.sshfl [vmem:[#allocation1 + $0x8] sm:$0xff pattern:$0x75316420]
      %v1037 = vld.sshfl [vmem:[#allocation1 + $0x10] sm:$0xff pattern:$0x75316420]
      %v1038 = vld.sshfl [vmem:[#allocation1 + $0x18] sm:$0xff pattern:$0x75316420]
      %1039 = vrot.lane.b32.xlu0 %v1035, 124
      %v1040 = vpop.permute.xlu0 %1039
      %1041 = vrot.lane.b32.xlu0 %v1036, 124
      %v1042 = vpop.permute.xlu0 %1041
      %1043 = vrot.lane.b32.xlu0 %v1037, 124
      %v1044 = vpop.permute.xlu0 %1043
      %1045 = vrot.lane.b32.xlu0 %v1038, 124
      %v1046 = vpop.permute.xlu0 %1045
      %v1047 = vsel %vm434, %v1040, %v1042
      %v1048 = vsel %vm434, %v1042, %v1044
      %v1049 = vsel %vm434, %v1044, %v1046
      %1055 = vst [vmem:[#allocation1] ss:$2 sm:$0xff] %v1012
      %s1056 = scalar_lea.vmem [#allocation1], 16
      %1057 = vst [vmem:[%s1056] ss:$2 sm:$0xff] %v1013
      %s1058 = scalar_lea.vmem [#allocation1], 32
      %1059 = vst [vmem:[%s1058] ss:$2 sm:$0xff] %v1014
      %v1060 = vld.sshfl [vmem:[#allocation1] sm:$0xff pattern:$0x75316420]
      %v1061 = vld.sshfl [vmem:[#allocation1 + $0x8] sm:$0xff pattern:$0x75316420]
      %v1062 = vld.sshfl [vmem:[#allocation1 + $0x10] sm:$0xff pattern:$0x75316420]
      %v1063 = vld.sshfl [vmem:[#allocation1 + $0x18] sm:$0xff pattern:$0x75316420]
      %v1064 = vld.sshfl [vmem:[#allocation1 + $0x20] sm:$0xff pattern:$0x75316420]
      %1065 = vrot.lane.b32.xlu0 %v1060, 120
      %v1066 = vpop.permute.xlu0 %1065
      %1067 = vrot.lane.b32.xlu0 %v1061, 120
      %v1068 = vpop.permute.xlu0 %1067
      %1069 = vrot.lane.b32.xlu0 %v1062, 120
      %v1070 = vpop.permute.xlu0 %1069
      %1071 = vrot.lane.b32.xlu0 %v1063, 120
      %v1072 = vpop.permute.xlu0 %1071
      %1073 = vrot.lane.b32.xlu0 %v1064, 120
      %v1074 = vpop.permute.xlu0 %1073
      %vm1075 = vcmask 982016
      %v1076 = vsel %vm1075, %v1066, %v1068
      %v1077 = vsel %vm1075, %v1068, %v1070
      %v1078 = vsel %vm1075, %v1070, %v1072
      %v1079 = vsel %vm1075, %v1072, %v1074
      %s1086 = scalar_lea.vmem [#allocation1], 1
      %1087 = vst [vmem:[%s1086] ss:$2 sm:$0xff] %v1015
      %s1088 = scalar_lea.vmem [#allocation1], 17
      %1089 = vst [vmem:[%s1088] ss:$2 sm:$0xff] %v1016
      %v1090 = vld.sshfl [vmem:[#allocation1] sm:$0xff pattern:$0x75316420]
      %v1091 = vld.sshfl [vmem:[#allocation1 + $0x8] sm:$0xff pattern:$0x75316420]
      %v1092 = vld.sshfl [vmem:[#allocation1 + $0x10] sm:$0xff pattern:$0x75316420]
      %v1093 = vld.sshfl [vmem:[#allocation1 + $0x18] sm:$0xff pattern:$0x75316420]
      %1094 = vrot.lane.b32.xlu0 %v1090, 16
      %v1095 = vpop.permute.xlu0 %1094
      %1096 = vrot.lane.b32.xlu0 %v1091, 16
      %v1097 = vpop.permute.xlu0 %1096
      %1098 = vrot.lane.b32.xlu0 %v1092, 16
      %v1099 = vpop.permute.xlu0 %1098
      %1100 = vrot.lane.b32.xlu0 %v1093, 16
      %v1101 = vpop.permute.xlu0 %1100
      %v1102 = vsel %vm541, %v1095, %v1097
      %v1103 = vsel %vm541, %v1097, %v1099
      %v1104 = vsel %vm541, %v1099, %v1101
      %1109 = vst [vmem:[#allocation1] ss:$2 sm:$0xff] %v1015
      %s1110 = scalar_lea.vmem [#allocation1], 16
      %1111 = vst [vmem:[%s1110] ss:$2 sm:$0xff] %v1016
      %v1112 = vld.sshfl [vmem:[#allocation1] sm:$0xff pattern:$0x75316420]
      %v1113 = vld.sshfl [vmem:[#allocation1 + $0x8] sm:$0xff pattern:$0x75316420]
      %v1114 = vld.sshfl [vmem:[#allocation1 + $0x10] sm:$0xff pattern:$0x75316420]
      %v1115 = vld.sshfl [vmem:[#allocation1 + $0x18] sm:$0xff pattern:$0x75316420]
      %1116 = vrot.lane.b32.xlu0 %v1112, 12
      %v1117 = vpop.permute.xlu0 %1116
      %1118 = vrot.lane.b32.xlu0 %v1113, 12
      %v1119 = vpop.permute.xlu0 %1118
      %1120 = vrot.lane.b32.xlu0 %v1114, 12
      %v1121 = vpop.permute.xlu0 %1120
      %1122 = vrot.lane.b32.xlu0 %v1115, 12
      %v1123 = vpop.permute.xlu0 %1122
      %v1124 = vsel %vm601, %v1117, %v1119
      %v1125 = vsel %vm601, %v1119, %v1121
      %v1126 = vsel %vm601, %v1121, %v1123
      %s1131 = scalar_lea.vmem [#allocation1], 1
      %1132 = vst [vmem:[%s1131] ss:$2 sm:$0xff] %v1015
      %s1133 = scalar_lea.vmem [#allocation1], 17
      %1134 = vst [vmem:[%s1133] ss:$2 sm:$0xff] %v1016
      %v1135 = vld.sshfl [vmem:[#allocation1] sm:$0xff pattern:$0x75316420]
      %v1136 = vld.sshfl [vmem:[#allocation1 + $0x8] sm:$0xff pattern:$0x75316420]
      %v1137 = vld.sshfl [vmem:[#allocation1 + $0x10] sm:$0xff pattern:$0x75316420]
      %v1138 = vld.sshfl [vmem:[#allocation1 + $0x18] sm:$0xff pattern:$0x75316420]
      %1139 = vrot.lane.b32.xlu0 %v1135, 8
      %v1140 = vpop.permute.xlu0 %1139
      %1141 = vrot.lane.b32.xlu0 %v1136, 8
      %v1142 = vpop.permute.xlu0 %1141
      %1143 = vrot.lane.b32.xlu0 %v1137, 8
      %v1144 = vpop.permute.xlu0 %1143
      %1145 = vrot.lane.b32.xlu0 %v1138, 8
      %v1146 = vpop.permute.xlu0 %1145
      %vm1147 = vcmask 64512
      %v1148 = vsel %vm1147, %v1140, %v1142
      %v1149 = vsel %vm1147, %v1142, %v1144
      %v1150 = vsel %vm1147, %v1144, %v1146
      %1156 = vst [vmem:[#allocation1] ss:$2 sm:$0xff] %v1013
      %s1157 = scalar_lea.vmem [#allocation1], 16
      %1158 = vst [vmem:[%s1157] ss:$2 sm:$0xff] %v1017
      %v1159 = vld.sshfl [vmem:[#allocation1] sm:$0xff pattern:$0x75316420]
      %v1160 = vld.sshfl [vmem:[#allocation1 + $0x8] sm:$0xff pattern:$0x75316420]
      %v1161 = vld.sshfl [vmem:[#allocation1 + $0x10] sm:$0xff pattern:$0x75316420]
      %v1162 = vld.sshfl [vmem:[#allocation1 + $0x18] sm:$0xff pattern:$0x75316420]
      %1163 = vrot.lane.b32.xlu0 %v1159, 32
      %v1164 = vpop.permute.xlu0 %1163
      %1165 = vrot.lane.b32.xlu0 %v1160, 32
      %v1166 = vpop.permute.xlu0 %1165
      %1167 = vrot.lane.b32.xlu0 %v1161, 32
      %v1168 = vpop.permute.xlu0 %1167
      %1169 = vrot.lane.b32.xlu0 %v1162, 32
      %v1170 = vpop.permute.xlu0 %1169
      %v1171 = vsel %vm886, %v1164, %v1166
      %v1172 = vsel %vm886, %v1166, %v1168
      %v1173 = vsel %vm886, %v1168, %v1170
      %s1178 = scalar_lea.vmem [#allocation1], 1
      %1179 = vst [vmem:[%s1178] ss:$2 sm:$0xff] %v1013
      %s1180 = scalar_lea.vmem [#allocation1], 17
      %1181 = vst [vmem:[%s1180] ss:$2 sm:$0xff] %v1017
      %v1182 = vld.sshfl [vmem:[#allocation1] sm:$0xff pattern:$0x75316420]
      %v1183 = vld.sshfl [vmem:[#allocation1 + $0x8] sm:$0xff pattern:$0x75316420]
      %v1184 = vld.sshfl [vmem:[#allocation1 + $0x10] sm:$0xff pattern:$0x75316420]
      %v1185 = vld.sshfl [vmem:[#allocation1 + $0x18] sm:$0xff pattern:$0x75316420]
      %1186 = vrot.lane.b32.xlu0 %v1182, 28
      %v1187 = vpop.permute.xlu0 %1186
      %1188 = vrot.lane.b32.xlu0 %v1183, 28
      %v1189 = vpop.permute.xlu0 %1188
      %1190 = vrot.lane.b32.xlu0 %v1184, 28
      %v1191 = vpop.permute.xlu0 %1190
      %1192 = vrot.lane.b32.xlu0 %v1185, 28
      %v1193 = vpop.permute.xlu0 %1192
      %vm1194 = vcmask 228352
      %v1195 = vsel %vm1194, %v1187, %v1189
      %v1196 = vsel %vm1194, %v1189, %v1191
      %v1197 = vsel %vm1194, %v1191, %v1193
      %1202 = vst [vmem:[#allocation1] ss:$2 sm:$0xff] %v1013
      %s1203 = scalar_lea.vmem [#allocation1], 16
      %1204 = vst [vmem:[%s1203] ss:$2 sm:$0xff] %v1017
      %v1205 = vld.sshfl [vmem:[#allocation1] sm:$0xff pattern:$0x75316420]
      %v1206 = vld.sshfl [vmem:[#allocation1 + $0x8] sm:$0xff pattern:$0x75316420]
      %v1207 = vld.sshfl [vmem:[#allocation1 + $0x10] sm:$0xff pattern:$0x75316420]
      %v1208 = vld.sshfl [vmem:[#allocation1 + $0x18] sm:$0xff pattern:$0x75316420]
      %1209 = vrot.lane.b32.xlu0 %v1205, 24
      %v1210 = vpop.permute.xlu0 %1209
      %1211 = vrot.lane.b32.xlu0 %v1206, 24
      %v1212 = vpop.permute.xlu0 %1211
      %1213 = vrot.lane.b32.xlu0 %v1207, 24
      %v1214 = vpop.permute.xlu0 %1213
      %1215 = vrot.lane.b32.xlu0 %v1208, 24
      %v1216 = vpop.permute.xlu0 %1215
      %vm1217 = vcmask 195584
      %v1218 = vsel %vm1217, %v1210, %v1212
      %v1219 = vsel %vm1217, %v1212, %v1214
      %v1220 = vsel %vm1217, %v1214, %v1216
      %v1221 = vsel %vm606, %v1023, %v1047
      %v1222 = vsel %vm606, %v1024, %v1048
      %v1223 = vsel %vm606, %v1025, %v1049
      %v1224 = vsel %vm606, %v1026, %v1046
      %v1225 = vsel %vm606, %v1076, %v1095
      %v1226 = vsel %vm606, %v1077, %v1102
      %v1227 = vsel %vm606, %v1078, %v1103
      %v1228 = vsel %vm606, %v1079, %v1104
      %v1229 = vsel %vm606, %v1117, %v1140
      %v1230 = vsel %vm606, %v1124, %v1148
      %v1231 = vsel %vm606, %v1125, %v1149
      %v1232 = vsel %vm606, %v1126, %v1150
      %v1233 = vsel %vm606, %v1164, %v1187
      %v1234 = vsel %vm606, %v1171, %v1195
      %v1235 = vsel %vm606, %v1172, %v1196
      %v1236 = vsel %vm606, %v1173, %v1197
      %s1237 = scalar_lea.vmem %s3, 4
      %v1238 = vld [vmem:[%s1237] sm:$0xf]
      %s1239 = scalar_lea.vmem %s4, 4
      %v1240 = vld [vmem:[%s1239] sm:$0xf]
      %1242 = vset.pattern.permute.xlu0 0
      %1243 = vperm.xlu0 %1242, %v1240
      %v1244 = vpop.permute.xlu0 %1243
      %1262 = vrot.lane.b32.xlu0 %v1221, 70
      %v1263 = vpop.permute.xlu0 %1262
      %1264 = vrot.lane.b32.xlu0 %v1222, 70
      %v1265 = vpop.permute.xlu0 %1264
      %1266 = vrot.lane.b32.xlu0 %v1223, 70
      %v1267 = vpop.permute.xlu0 %1266
      %1268 = vrot.lane.b32.xlu0 %v1224, 70
      %v1269 = vpop.permute.xlu0 %1268
      %1270 = vrot.lane.b32.xlu0 %v1225, 70
      %v1271 = vpop.permute.xlu0 %1270
      %1272 = vrot.lane.b32.xlu0 %v1226, 70
      %v1273 = vpop.permute.xlu0 %1272
      %1274 = vrot.lane.b32.xlu0 %v1227, 70
      %v1275 = vpop.permute.xlu0 %1274
      %1276 = vrot.lane.b32.xlu0 %v1228, 70
      %v1277 = vpop.permute.xlu0 %1276
      %1278 = vrot.lane.b32.xlu0 %v1229, 70
      %v1279 = vpop.permute.xlu0 %1278
      %1280 = vrot.lane.b32.xlu0 %v1230, 70
      %v1281 = vpop.permute.xlu0 %1280
      %1282 = vrot.lane.b32.xlu0 %v1231, 70
      %v1283 = vpop.permute.xlu0 %1282
      %1284 = vrot.lane.b32.xlu0 %v1232, 70
      %v1285 = vpop.permute.xlu0 %1284
      %1286 = vrot.lane.b32.xlu0 %v1233, 70
      %v1287 = vpop.permute.xlu0 %1286
      %1288 = vrot.lane.b32.xlu0 %v1234, 70
      %v1289 = vpop.permute.xlu0 %1288
      %1290 = vrot.lane.b32.xlu0 %v1235, 70
      %v1291 = vpop.permute.xlu0 %1290
      %1292 = vrot.lane.b32.xlu0 %v1236, 70
      %v1293 = vpop.permute.xlu0 %1292
      %1294 = vrot.lane.b32.xlu0 %v1210, 70
      %v1295 = vpop.permute.xlu0 %1294
      %1296 = vrot.lane.b32.xlu0 %v1218, 70
      %v1297 = vpop.permute.xlu0 %1296
      %1298 = vrot.lane.b32.xlu0 %v1219, 70
      %v1299 = vpop.permute.xlu0 %1298
      %1300 = vrot.lane.b32.xlu0 %v1220, 70
      %v1301 = vpop.permute.xlu0 %1300
      %v1302 = vsel %vm486, %v1263, %v1265
      %v1303 = vsel %vm486, %v1265, %v1267
      %v1304 = vsel %vm486, %v1267, %v1269
      %v1305 = vsel %vm486, %v1271, %v1273
      %v1306 = vsel %vm486, %v1273, %v1275
      %v1307 = vsel %vm486, %v1275, %v1277
      %v1308 = vsel %vm486, %v1279, %v1281
      %v1309 = vsel %vm486, %v1281, %v1283
      %v1310 = vsel %vm486, %v1283, %v1285
      %v1311 = vsel %vm486, %v1287, %v1289
      %v1312 = vsel %vm486, %v1289, %v1291
      %v1313 = vsel %vm486, %v1291, %v1293
      %v1314 = vsel %vm486, %v1295, %v1297
      %v1315 = vsel %vm486, %v1297, %v1299
      %v1316 = vsel %vm486, %v1299, %v1301
      %v1334 = vsel %vm740, %v1238, 0
      %v1336 = vsel %vm606, %v1314, 0
      %v1338 = vsel %vm606, %v1315, 0
      %v1340 = vsel %vm606, %v1316, 0
      %v1342 = vsel %vm606, %v1301, 0
      %1344 = vmatpush.msra.mxu0 0.0
      %1345 = vmatpush.msra.mxu0 0.0
      %1346 = vmatpush.msra.mxu0 0.0
      %1347 = vmatpush.msra.mxu0 0.0
      %1348 = vmatpush.msra.mxu0 0.0
      %1349 = vmatpush.msra.mxu0 0.0
      %1350 = vmatpush.msra.mxu0 0.0
      %1351 = vmatpush.msra.mxu0 0.0
      %1352 = vmatpush.msra.mxu0 0.0
      %1353 = vmatpush.msra.mxu0 0.0
      %1354 = vmatpush.msra.mxu0 0.0
      %1355 = vmatpush.msra.mxu0 %v1336
      %1356 = vmatpush.msra.mxu0 %v1311
      %1357 = vmatpush.msra.mxu0 %v1308
      %1358 = vmatpush.msra.mxu0 %v1305
      %1359 = vmatpush.msra.mxu0 %v1302
      %1360 = vmatmul.f32.gmra.mxu0 %v1334
      %v1361 = vpop.f32.mrf.mxu0
      %v1362 = vadd.f32 %v1244, %v1361
      %1363 = vdwg.mxu0
      %1364 = vmatpush.msra.mxu0 0.0
      %1365 = vmatpush.msra.mxu0 0.0
      %1366 = vmatpush.msra.mxu0 0.0
      %1367 = vmatpush.msra.mxu0 0.0
      %1368 = vmatpush.msra.mxu0 0.0
      %1369 = vmatpush.msra.mxu0 0.0
      %1370 = vmatpush.msra.mxu0 0.0
      %1371 = vmatpush.msra.mxu0 0.0
      %1372 = vmatpush.msra.mxu0 0.0
      %1373 = vmatpush.msra.mxu0 0.0
      %1374 = vmatpush.msra.mxu0 0.0
      %1375 = vmatpush.msra.mxu0 %v1338
      %1376 = vmatpush.msra.mxu0 %v1312
      %1377 = vmatpush.msra.mxu0 %v1309
      %1378 = vmatpush.msra.mxu0 %v1306
      %1379 = vmatpush.msra.mxu0 %v1303
      %1380 = vmatmul.f32.gmra.mxu0 %v1334
      %v1381 = vpop.f32.mrf.mxu0
      %v1382 = vadd.f32 %v1244, %v1381
      %1383 = vdwg.mxu0
      %1384 = vmatpush.msra.mxu0 0.0
      %1385 = vmatpush.msra.mxu0 0.0
      %1386 = vmatpush.msra.mxu0 0.0
      %1387 = vmatpush.msra.mxu0 0.0
      %1388 = vmatpush.msra.mxu0 0.0
      %1389 = vmatpush.msra.mxu0 0.0
      %1390 = vmatpush.msra.mxu0 0.0
      %1391 = vmatpush.msra.mxu0 0.0
      %1392 = vmatpush.msra.mxu0 0.0
      %1393 = vmatpush.msra.mxu0 0.0
      %1394 = vmatpush.msra.mxu0 0.0
      %1395 = vmatpush.msra.mxu0 %v1340
      %1396 = vmatpush.msra.mxu0 %v1313
      %1397 = vmatpush.msra.mxu0 %v1310
      %1398 = vmatpush.msra.mxu0 %v1307
      %1399 = vmatpush.msra.mxu0 %v1304
      %1400 = vmatmul.f32.gmra.mxu0 %v1334
      %v1401 = vpop.f32.mrf.mxu0
      %v1402 = vadd.f32 %v1244, %v1401
      %1403 = vdwg.mxu0
      %1404 = vmatpush.msra.mxu0 0.0
      %1405 = vmatpush.msra.mxu0 0.0
      %1406 = vmatpush.msra.mxu0 0.0
      %1407 = vmatpush.msra.mxu0 0.0
      %1408 = vmatpush.msra.mxu0 0.0
      %1409 = vmatpush.msra.mxu0 0.0
      %1410 = vmatpush.msra.mxu0 0.0
      %1411 = vmatpush.msra.mxu0 0.0
      %1412 = vmatpush.msra.mxu0 0.0
      %1413 = vmatpush.msra.mxu0 0.0
      %1414 = vmatpush.msra.mxu0 0.0
      %1415 = vmatpush.msra.mxu0 %v1342
      %1416 = vmatpush.msra.mxu0 %v1293
      %1417 = vmatpush.msra.mxu0 %v1285
      %1418 = vmatpush.msra.mxu0 %v1277
      %1419 = vmatpush.msra.mxu0 %v1269
      %1420 = vmatmul.f32.gmra.mxu0 %v1334
      %v1421 = vpop.f32.mrf.mxu0
      %v1422 = vadd.f32 %v1244, %v1421
      %1423 = vdwg.mxu0
      %1425 = vrot.lane.b32.xlu0 %v1362, 116
      %v1426 = vpop.permute.xlu0 %1425
      %1428 = vrot.lane.b32.xlu0 %v1362, 104
      %v1429 = vpop.permute.xlu0 %1428
      %1431 = vrot.lane.b32.xlu0 %v1362, 92
      %v1432 = vpop.permute.xlu0 %1431
      %1434 = vrot.lane.b32.xlu0 %v1362, 80
      %v1435 = vpop.permute.xlu0 %1434
      %1438 = vrot.lane.b32.xlu0 %v1382, 68
      %v1439 = vpop.permute.xlu0 %1438
      %1441 = vrot.lane.b32.xlu0 %v1382, 56
      %v1442 = vpop.permute.xlu0 %1441
      %1444 = vrot.lane.b32.xlu0 %v1382, 44
      %v1445 = vpop.permute.xlu0 %1444
      %1447 = vrot.lane.b32.xlu0 %v1382, 32
      %v1448 = vpop.permute.xlu0 %1447
      %1451 = vrot.lane.b32.xlu0 %v1382, 20
      %v1452 = vpop.permute.xlu0 %1451
      %1453 = vrot.lane.b32.xlu0 %v1402, 20
      %v1454 = vpop.permute.xlu0 %1453
      %v1455 = vsel %vm863, %v1452, %v1454
      %1457 = vrot.lane.b32.xlu0 %v1402, 8
      %v1458 = vpop.permute.xlu0 %1457
      %1460 = vrot.lane.b32.xlu0 %v1402, 124
      %v1461 = vpop.permute.xlu0 %1460
      %1463 = vrot.lane.b32.xlu0 %v1402, 112
      %v1464 = vpop.permute.xlu0 %1463
      %1466 = vrot.lane.b32.xlu0 %v1402, 100
      %v1467 = vpop.permute.xlu0 %1466
      %1470 = vrot.lane.b32.xlu0 %v1422, 88
      %v1471 = vpop.permute.xlu0 %1470
      %1473 = vrot.lane.b32.xlu0 %v1422, 76
      %v1474 = vpop.permute.xlu0 %1473
      %v1476 = vsel %vm541, %v1362, %v1426
      %v1477 = vsel %vm886, %v1476, %v1429
      %v1478 = vsel %vm888, %v1477, %v1432
      %v1479 = vsel %vm890, %v1478, %v1435
      %v1480 = vsel %vm892, %v1479, %v1439
      %v1481 = vsel %vm894, %v1480, %v1442
      %v1482 = vsel %vm896, %v1481, %v1445
      %v1483 = vsel %vm541, %v1448, %v1455
      %v1484 = vsel %vm886, %v1483, %v1458
      %v1485 = vsel %vm888, %v1484, %v1461
      %v1486 = vsel %vm890, %v1485, %v1464
      %v1487 = vsel %vm892, %v1486, %v1467
      %v1488 = vsel %vm894, %v1487, %v1471
      %v1489 = vsel %vm896, %v1488, %v1474
      %v1492 = vrot.slane %v1482, 4
      %v1493 = vrot.slane %v1489, 4
      %1496 = vst [vmem:[%s224] sm:$0xf0] %v1492
      %1497 = vst [vmem:[%s224 + $0x8] sm:$0xf0] %v1493
      %s1498 = scalar_lea.vmem %s1, 8
      %v1499 = vld [vmem:[%s1498] sm:$0xf]
      %1501 = vset.pattern.permute.xlu0 0
      %1502 = vperm.xlu0 %1501, %v1499
      %v1503 = vpop.permute.xlu0 %1502
      %v1505 = vunpack.c.l.s4 839922192
      %v1506 = vunpack.c.0.s8 %v1505
      %v1507 = vperm.slane %v1503, %v1506
      %v1509 = vmul.f32 %v229, %v1507
      %s1510 = scalar_lea.vmem %s2, 8
      %v1511 = vld [vmem:[%s1510] sm:$0xf]
      %1513 = vset.pattern.permute.xlu0 0
      %1514 = vperm.xlu0 %1513, %v1511
      %v1515 = vpop.permute.xlu0 %1514
      %v1517 = vunpack.c.l.s4 839922192
      %v1518 = vunpack.c.0.s8 %v1517
      %v1519 = vperm.slane %v1515, %v1518
      %v1521 = vadd.f32 %v1509, %v1519
      %v1522 = vmax.f32 %v1521, 0.0
      %1524 = vrot.lane.b32.xlu0 %v1522, 46
      %v1525 = vpop.permute.xlu0 %1524
      %1527 = vst.msk [vmem:[#allocation2 + $0x4] sm:$0xf] %vm257, %v1525
      %1528 = vrot.lane.b32.xlu0 %v1522, 58
      %v1529 = vpop.permute.xlu0 %1528
      %1531 = vst.msk [vmem:[#allocation2 + $0x4] sm:$0xf] %vm262, %v1529
      %1532 = vrot.lane.b32.xlu0 %v1522, 70
      %v1533 = vpop.permute.xlu0 %1532
      %1535 = vst.msk [vmem:[#allocation2 + $0x4] sm:$0xf] %vm267, %v1533
      %1536 = vrot.lane.b32.xlu0 %v1522, 82
      %v1537 = vpop.permute.xlu0 %1536
      %1539 = vst.msk [vmem:[#allocation2 + $0x8] sm:$0xf] %vm272, %v1537
      %1540 = vrot.lane.b32.xlu0 %v1522, 94
      %v1541 = vpop.permute.xlu0 %1540
      %1543 = vst.msk [vmem:[#allocation2 + $0x8] sm:$0xf] %vm277, %v1541
      %1544 = vrot.lane.b32.xlu0 %v1522, 106
      %v1545 = vpop.permute.xlu0 %1544
      %1547 = vst.msk [vmem:[#allocation2 + $0x8] sm:$0xf] %vm282, %v1545
      %1548 = vrot.lane.b32.xlu0 %v1522, 118
      %v1549 = vpop.permute.xlu0 %1548
      %1551 = vst.msk [vmem:[#allocation2 + $0x8] sm:$0xf] %vm287, %v1549
      %1552 = vrot.lane.b32.xlu0 %v1522, 2
      %v1553 = vpop.permute.xlu0 %1552
      %v1554 = vrot.slane %v1553, 4
      %v1555 = vsel %vm292, %v1554, %v1553
      %1557 = vst.msk [vmem:[#allocation2 + $0x8] sm:$0xff] %vm297, %v1555
      %1558 = vrot.lane.b32.xlu0 %v1522, 14
      %v1559 = vpop.permute.xlu0 %1558
      %v1560 = vrot.slane %v1559, 4
      %v1561 = vsel %vm302, %v1559, %v1560
      %1563 = vst.msk [vmem:[#allocation2 + $0xc] sm:$0xf] %vm305, %v1561
      %1564 = vrot.lane.b32.xlu0 %v1522, 26
      %v1565 = vpop.permute.xlu0 %1564
      %v1566 = vrot.slane %v1565, 4
      %v1567 = vsel %vm310, %v1565, %v1566
      %1569 = vst.msk [vmem:[#allocation2 + $0xc] sm:$0xf] %vm313, %v1567
      %1570 = vrot.lane.b32.xlu0 %v1522, 38
      %v1571 = vpop.permute.xlu0 %1570
      %v1572 = vrot.slane %v1571, 4
      %v1573 = vsel %vm318, %v1571, %v1572
      %1575 = vst.msk [vmem:[#allocation2 + $0xc] sm:$0xf] %vm321, %v1573
      %1576 = vrot.lane.b32.xlu0 %v1522, 50
      %v1577 = vpop.permute.xlu0 %1576
      %v1578 = vrot.slane %v1577, 4
      %v1579 = vsel %vm326, %v1577, %v1578
      %1581 = vst.msk [vmem:[#allocation2 + $0xc] sm:$0xf] %vm329, %v1579
      %1582 = vrot.lane.b32.xlu0 %v1522, 62
      %v1583 = vpop.permute.xlu0 %1582
      %v1584 = vrot.slane %v1583, 4
      %v1585 = vsel %vm334, %v1583, %v1584
      %1587 = vst.msk [vmem:[#allocation2 + $0xc] sm:$0xff] %vm339, %v1585
      %1588 = vrot.lane.b32.xlu0 %v1522, 74
      %v1589 = vpop.permute.xlu0 %1588
      %v1590 = vrot.slane %v1589, 4
      %1592 = vst.msk [vmem:[#allocation2 + $0x10] sm:$0xf] %vm345, %v1590
      %1593 = vrot.lane.b32.xlu0 %v1522, 86
      %v1594 = vpop.permute.xlu0 %1593
      %v1595 = vrot.slane %v1594, 4
      %1597 = vst.msk [vmem:[#allocation2 + $0x10] sm:$0xf] %vm351, %v1595
      %1598 = vrot.lane.b32.xlu0 %v1522, 98
      %v1599 = vpop.permute.xlu0 %1598
      %v1600 = vrot.slane %v1599, 4
      %1602 = vst.msk [vmem:[#allocation2 + $0x10] sm:$0xf] %vm357, %v1600
      %v1603 = vld [vmem:[#allocation2] sm:$0xff]
      %v1604 = vld [vmem:[#allocation2 + $0x8] sm:$0xff]
      %v1605 = vld [vmem:[#allocation2 + $0x4] sm:$0xff]
      %v1606 = vld [vmem:[#allocation2 + $0xc] sm:$0xff]
      %v1607 = vld [vmem:[#allocation2 + $0x8] sm:$0xff]
      %v1608 = vld [vmem:[#allocation2 + $0x10] sm:$0xff]
      %v1609 = vld [vmem:[#allocation2 + $0x18] sm:$0xf]
      %1612 = vst [vmem:[#allocation1] ss:$2 sm:$0xff] %v1603
      %s1613 = scalar_lea.vmem [#allocation1], 16
      %1614 = vst [vmem:[%s1613] ss:$2 sm:$0xff] %v1604
      %v1615 = vld.sshfl [vmem:[#allocation1] sm:$0xff pattern:$0x75316420]
      %v1616 = vld.sshfl [vmem:[#allocation1 + $0x8] sm:$0xff pattern:$0x75316420]
      %v1617 = vld.sshfl [vmem:[#allocation1 + $0x10] sm:$0xff pattern:$0x75316420]
      %v1618 = vld.sshfl [vmem:[#allocation1 + $0x18] sm:$0xff pattern:$0x75316420]
      %s1623 = scalar_lea.vmem [#allocation1], 1
      %1624 = vst [vmem:[%s1623] ss:$2 sm:$0xff] %v1603
      %s1625 = scalar_lea.vmem [#allocation1], 17
      %1626 = vst [vmem:[%s1625] ss:$2 sm:$0xff] %v1604
      %v1627 = vld.sshfl [vmem:[#allocation1] sm:$0xff pattern:$0x75316420]
      %v1628 = vld.sshfl [vmem:[#allocation1 + $0x8] sm:$0xff pattern:$0x75316420]
      %v1629 = vld.sshfl [vmem:[#allocation1 + $0x10] sm:$0xff pattern:$0x75316420]
      %v1630 = vld.sshfl [vmem:[#allocation1 + $0x18] sm:$0xff pattern:$0x75316420]
      %1631 = vrot.lane.b32.xlu0 %v1627, 122
      %v1632 = vpop.permute.xlu0 %1631
      %1633 = vrot.lane.b32.xlu0 %v1628, 122
      %v1634 = vpop.permute.xlu0 %1633
      %1635 = vrot.lane.b32.xlu0 %v1629, 122
      %v1636 = vpop.permute.xlu0 %1635
      %1637 = vrot.lane.b32.xlu0 %v1630, 122
      %v1638 = vpop.permute.xlu0 %1637
      %vm1639 = vcmask 998400
      %v1640 = vsel %vm1639, %v1632, %v1634
      %v1641 = vsel %vm1639, %v1634, %v1636
      %v1642 = vsel %vm1639, %v1636, %v1638
      %1647 = vst [vmem:[#allocation1] ss:$2 sm:$0xff] %v1603
      %s1648 = scalar_lea.vmem [#allocation1], 16
      %1649 = vst [vmem:[%s1648] ss:$2 sm:$0xff] %v1604
      %v1650 = vld.sshfl [vmem:[#allocation1] sm:$0xff pattern:$0x75316420]
      %v1651 = vld.sshfl [vmem:[#allocation1 + $0x8] sm:$0xff pattern:$0x75316420]
      %v1652 = vld.sshfl [vmem:[#allocation1 + $0x10] sm:$0xff pattern:$0x75316420]
      %v1653 = vld.sshfl [vmem:[#allocation1 + $0x18] sm:$0xff pattern:$0x75316420]
      %1654 = vrot.lane.b32.xlu0 %v1650, 116
      %v1655 = vpop.permute.xlu0 %1654
      %1656 = vrot.lane.b32.xlu0 %v1651, 116
      %v1657 = vpop.permute.xlu0 %1656
      %1658 = vrot.lane.b32.xlu0 %v1652, 116
      %v1659 = vpop.permute.xlu0 %1658
      %1660 = vrot.lane.b32.xlu0 %v1653, 116
      %v1661 = vpop.permute.xlu0 %1660
      %vm1662 = vcmask 949248
      %v1663 = vsel %vm1662, %v1655, %v1657
      %v1664 = vsel %vm1662, %v1657, %v1659
      %v1665 = vsel %vm1662, %v1659, %v1661
      %s1672 = scalar_lea.vmem [#allocation1], 1
      %1673 = vst [vmem:[%s1672] ss:$2 sm:$0xff] %v1605
      %s1674 = scalar_lea.vmem [#allocation1], 17
      %1675 = vst [vmem:[%s1674] ss:$2 sm:$0xff] %v1606
      %v1676 = vld.sshfl [vmem:[#allocation1] sm:$0xff pattern:$0x75316420]
      %v1677 = vld.sshfl [vmem:[#allocation1 + $0x8] sm:$0xff pattern:$0x75316420]
      %v1678 = vld.sshfl [vmem:[#allocation1 + $0x10] sm:$0xff pattern:$0x75316420]
      %v1679 = vld.sshfl [vmem:[#allocation1 + $0x18] sm:$0xff pattern:$0x75316420]
      %1680 = vrot.lane.b32.xlu0 %v1676, 88
      %v1681 = vpop.permute.xlu0 %1680
      %1682 = vrot.lane.b32.xlu0 %v1677, 88
      %v1683 = vpop.permute.xlu0 %1682
      %1684 = vrot.lane.b32.xlu0 %v1678, 88
      %v1685 = vpop.permute.xlu0 %1684
      %1686 = vrot.lane.b32.xlu0 %v1679, 88
      %v1687 = vpop.permute.xlu0 %1686
      %vm1688 = vcmask 719872
      %v1689 = vsel %vm1688, %v1681, %v1683
      %v1690 = vsel %vm1688, %v1683, %v1685
      %v1691 = vsel %vm1688, %v1685, %v1687
      %1696 = vst [vmem:[#allocation1] ss:$2 sm:$0xff] %v1605
      %s1697 = scalar_lea.vmem [#allocation1], 16
      %1698 = vst [vmem:[%s1697] ss:$2 sm:$0xff] %v1606
      %v1699 = vld.sshfl [vmem:[#allocation1] sm:$0xff pattern:$0x75316420]
      %v1700 = vld.sshfl [vmem:[#allocation1 + $0x8] sm:$0xff pattern:$0x75316420]
      %v1701 = vld.sshfl [vmem:[#allocation1 + $0x10] sm:$0xff pattern:$0x75316420]
      %v1702 = vld.sshfl [vmem:[#allocation1 + $0x18] sm:$0xff pattern:$0x75316420]
      %1703 = vrot.lane.b32.xlu0 %v1699, 82
      %v1704 = vpop.permute.xlu0 %1703
      %1705 = vrot.lane.b32.xlu0 %v1700, 82
      %v1706 = vpop.permute.xlu0 %1705
      %1707 = vrot.lane.b32.xlu0 %v1701, 82
      %v1708 = vpop.permute.xlu0 %1707
      %1709 = vrot.lane.b32.xlu0 %v1702, 82
      %v1710 = vpop.permute.xlu0 %1709
      %vm1711 = vcmask 670720
      %v1712 = vsel %vm1711, %v1704, %v1706
      %v1713 = vsel %vm1711, %v1706, %v1708
      %v1714 = vsel %vm1711, %v1708, %v1710
      %s1719 = scalar_lea.vmem [#allocation1], 1
      %1720 = vst [vmem:[%s1719] ss:$2 sm:$0xff] %v1605
      %s1721 = scalar_lea.vmem [#allocation1], 17
      %1722 = vst [vmem:[%s1721] ss:$2 sm:$0xff] %v1606
      %v1723 = vld.sshfl [vmem:[#allocation1] sm:$0xff pattern:$0x75316420]
      %v1724 = vld.sshfl [vmem:[#allocation1 + $0x8] sm:$0xff pattern:$0x75316420]
      %v1725 = vld.sshfl [vmem:[#allocation1 + $0x10] sm:$0xff pattern:$0x75316420]
      %v1726 = vld.sshfl [vmem:[#allocation1 + $0x18] sm:$0xff pattern:$0x75316420]
      %1727 = vrot.lane.b32.xlu0 %v1723, 76
      %v1728 = vpop.permute.xlu0 %1727
      %1729 = vrot.lane.b32.xlu0 %v1724, 76
      %v1730 = vpop.permute.xlu0 %1729
      %1731 = vrot.lane.b32.xlu0 %v1725, 76
      %v1732 = vpop.permute.xlu0 %1731
      %1733 = vrot.lane.b32.xlu0 %v1726, 76
      %v1734 = vpop.permute.xlu0 %1733
      %vm1735 = vcmask 621568
      %v1736 = vsel %vm1735, %v1728, %v1730
      %v1737 = vsel %vm1735, %v1730, %v1732
      %v1738 = vsel %vm1735, %v1732, %v1734
      %1746 = vst [vmem:[#allocation1] ss:$2 sm:$0xff] %v1607
      %s1747 = scalar_lea.vmem [#allocation1], 16
      %1748 = vst [vmem:[%s1747] ss:$2 sm:$0xff] %v1608
      %s1749 = scalar_lea.vmem [#allocation1], 32
      %1750 = vst [vmem:[%s1749] ss:$2 sm:$0xff] %v1609
      %v1751 = vld.sshfl [vmem:[#allocation1] sm:$0xff pattern:$0x75316420]
      %v1752 = vld.sshfl [vmem:[#allocation1 + $0x8] sm:$0xff pattern:$0x75316420]
      %v1753 = vld.sshfl [vmem:[#allocation1 + $0x10] sm:$0xff pattern:$0x75316420]
      %v1754 = vld.sshfl [vmem:[#allocation1 + $0x18] sm:$0xff pattern:$0x75316420]
      %v1755 = vld.sshfl [vmem:[#allocation1 + $0x20] sm:$0xff pattern:$0x75316420]
      %1756 = vrot.lane.b32.xlu0 %v1751, 48
      %v1757 = vpop.permute.xlu0 %1756
      %1758 = vrot.lane.b32.xlu0 %v1752, 48
      %v1759 = vpop.permute.xlu0 %1758
      %1760 = vrot.lane.b32.xlu0 %v1753, 48
      %v1761 = vpop.permute.xlu0 %1760
      %1762 = vrot.lane.b32.xlu0 %v1754, 48
      %v1763 = vpop.permute.xlu0 %1762
      %1764 = vrot.lane.b32.xlu0 %v1755, 48
      %v1765 = vpop.permute.xlu0 %1764
      %v1766 = vsel %vm888, %v1757, %v1759
      %v1767 = vsel %vm888, %v1759, %v1761
      %v1768 = vsel %vm888, %v1761, %v1763
      %v1769 = vsel %vm888, %v1763, %v1765
      %s1774 = scalar_lea.vmem [#allocation1], 1
      %1775 = vst [vmem:[%s1774] ss:$2 sm:$0xff] %v1607
      %s1776 = scalar_lea.vmem [#allocation1], 17
      %1777 = vst [vmem:[%s1776] ss:$2 sm:$0xff] %v1608
      %s1778 = scalar_lea.vmem [#allocation1], 33
      %1779 = vst [vmem:[%s1778] ss:$2 sm:$0xff] %v1609
      %v1780 = vld.sshfl [vmem:[#allocation1] sm:$0xff pattern:$0x75316420]
      %v1781 = vld.sshfl [vmem:[#allocation1 + $0x8] sm:$0xff pattern:$0x75316420]
      %v1782 = vld.sshfl [vmem:[#allocation1 + $0x10] sm:$0xff pattern:$0x75316420]
      %v1783 = vld.sshfl [vmem:[#allocation1 + $0x18] sm:$0xff pattern:$0x75316420]
      %v1784 = vld.sshfl [vmem:[#allocation1 + $0x20] sm:$0xff pattern:$0x75316420]
      %1785 = vrot.lane.b32.xlu0 %v1780, 42
      %v1786 = vpop.permute.xlu0 %1785
      %1787 = vrot.lane.b32.xlu0 %v1781, 42
      %v1788 = vpop.permute.xlu0 %1787
      %1789 = vrot.lane.b32.xlu0 %v1782, 42
      %v1790 = vpop.permute.xlu0 %1789
      %1791 = vrot.lane.b32.xlu0 %v1783, 42
      %v1792 = vpop.permute.xlu0 %1791
      %1793 = vrot.lane.b32.xlu0 %v1784, 42
      %v1794 = vpop.permute.xlu0 %1793
      %vm1795 = vcmask 343040
      %v1796 = vsel %vm1795, %v1786, %v1788
      %v1797 = vsel %vm1795, %v1788, %v1790
      %v1798 = vsel %vm1795, %v1790, %v1792
      %v1799 = vsel %vm1795, %v1792, %v1794
      %1804 = vst [vmem:[#allocation1] ss:$2 sm:$0xff] %v1607
      %s1805 = scalar_lea.vmem [#allocation1], 16
      %1806 = vst [vmem:[%s1805] ss:$2 sm:$0xff] %v1608
      %s1807 = scalar_lea.vmem [#allocation1], 32
      %1808 = vst [vmem:[%s1807] ss:$2 sm:$0xff] %v1609
      %v1809 = vld.sshfl [vmem:[#allocation1] sm:$0xff pattern:$0x75316420]
      %v1810 = vld.sshfl [vmem:[#allocation1 + $0x8] sm:$0xff pattern:$0x75316420]
      %v1811 = vld.sshfl [vmem:[#allocation1 + $0x10] sm:$0xff pattern:$0x75316420]
      %v1812 = vld.sshfl [vmem:[#allocation1 + $0x18] sm:$0xff pattern:$0x75316420]
      %v1813 = vld.sshfl [vmem:[#allocation1 + $0x20] sm:$0xff pattern:$0x75316420]
      %1814 = vrot.lane.b32.xlu0 %v1809, 36
      %v1815 = vpop.permute.xlu0 %1814
      %1816 = vrot.lane.b32.xlu0 %v1810, 36
      %v1817 = vpop.permute.xlu0 %1816
      %1818 = vrot.lane.b32.xlu0 %v1811, 36
      %v1819 = vpop.permute.xlu0 %1818
      %1820 = vrot.lane.b32.xlu0 %v1812, 36
      %v1821 = vpop.permute.xlu0 %1820
      %1822 = vrot.lane.b32.xlu0 %v1813, 36
      %v1823 = vpop.permute.xlu0 %1822
      %v1824 = vsel %vm740, %v1815, %v1817
      %v1825 = vsel %vm740, %v1817, %v1819
      %v1826 = vsel %vm740, %v1819, %v1821
      %v1827 = vsel %vm740, %v1821, %v1823
      %v1828 = vsel %vm606, %v1615, %v1640
      %v1829 = vsel %vm606, %v1616, %v1641
      %v1830 = vsel %vm606, %v1617, %v1642
      %v1831 = vsel %vm606, %v1618, %v1638
      %v1832 = vsel %vm606, %v1663, %v1689
      %v1833 = vsel %vm606, %v1664, %v1690
      %v1834 = vsel %vm606, %v1665, %v1691
      %v1835 = vsel %vm606, %v1661, %v1687
      %v1836 = vsel %vm606, %v1712, %v1736
      %v1837 = vsel %vm606, %v1713, %v1737
      %v1838 = vsel %vm606, %v1714, %v1738
      %v1839 = vsel %vm606, %v1710, %v1734
      %v1840 = vsel %vm606, %v1766, %v1796
      %v1841 = vsel %vm606, %v1767, %v1797
      %v1842 = vsel %vm606, %v1768, %v1798
      %v1843 = vsel %vm606, %v1769, %v1799
      %s1844 = scalar_lea.vmem %s3, 8
      %v1845 = vld [vmem:[%s1844] sm:$0xf]
      %s1846 = scalar_lea.vmem %s4, 8
      %v1847 = vld [vmem:[%s1846] sm:$0xf]
      %1849 = vset.pattern.permute.xlu0 0
      %1850 = vperm.xlu0 %1849, %v1847
      %v1851 = vpop.permute.xlu0 %1850
      %v1854 = vsel %vm740, %v1845, 0
      %v1856 = vsel %vm606, %v1824, 0
      %v1858 = vsel %vm606, %v1825, 0
      %v1860 = vsel %vm606, %v1826, 0
      %v1862 = vsel %vm606, %v1827, 0
      %1864 = vmatpush.msra.mxu0 0.0
      %1865 = vmatpush.msra.mxu0 0.0
      %1866 = vmatpush.msra.mxu0 0.0
      %1867 = vmatpush.msra.mxu0 0.0
      %1868 = vmatpush.msra.mxu0 0.0
      %1869 = vmatpush.msra.mxu0 0.0
      %1870 = vmatpush.msra.mxu0 0.0
      %1871 = vmatpush.msra.mxu0 0.0
      %1872 = vmatpush.msra.mxu0 0.0
      %1873 = vmatpush.msra.mxu0 0.0
      %1874 = vmatpush.msra.mxu0 0.0
      %1875 = vmatpush.msra.mxu0 %v1856
      %1876 = vmatpush.msra.mxu0 %v1840
      %1877 = vmatpush.msra.mxu0 %v1836
      %1878 = vmatpush.msra.mxu0 %v1832
      %1879 = vmatpush.msra.mxu0 %v1828
      %1880 = vmatmul.f32.gmra.mxu0 %v1854
      %v1881 = vpop.f32.mrf.mxu0
      %v1882 = vadd.f32 %v1851, %v1881
      %1883 = vdwg.mxu0
      %1884 = vmatpush.msra.mxu0 0.0
      %1885 = vmatpush.msra.mxu0 0.0
      %1886 = vmatpush.msra.mxu0 0.0
      %1887 = vmatpush.msra.mxu0 0.0
      %1888 = vmatpush.msra.mxu0 0.0
      %1889 = vmatpush.msra.mxu0 0.0
      %1890 = vmatpush.msra.mxu0 0.0
      %1891 = vmatpush.msra.mxu0 0.0
      %1892 = vmatpush.msra.mxu0 0.0
      %1893 = vmatpush.msra.mxu0 0.0
      %1894 = vmatpush.msra.mxu0 0.0
      %1895 = vmatpush.msra.mxu0 %v1858
      %1896 = vmatpush.msra.mxu0 %v1841
      %1897 = vmatpush.msra.mxu0 %v1837
      %1898 = vmatpush.msra.mxu0 %v1833
      %1899 = vmatpush.msra.mxu0 %v1829
      %1900 = vmatmul.f32.gmra.mxu0 %v1854
      %v1901 = vpop.f32.mrf.mxu0
      %v1902 = vadd.f32 %v1851, %v1901
      %1903 = vdwg.mxu0
      %1904 = vmatpush.msra.mxu0 0.0
      %1905 = vmatpush.msra.mxu0 0.0
      %1906 = vmatpush.msra.mxu0 0.0
      %1907 = vmatpush.msra.mxu0 0.0
      %1908 = vmatpush.msra.mxu0 0.0
      %1909 = vmatpush.msra.mxu0 0.0
      %1910 = vmatpush.msra.mxu0 0.0
      %1911 = vmatpush.msra.mxu0 0.0
      %1912 = vmatpush.msra.mxu0 0.0
      %1913 = vmatpush.msra.mxu0 0.0
      %1914 = vmatpush.msra.mxu0 0.0
      %1915 = vmatpush.msra.mxu0 %v1860
      %1916 = vmatpush.msra.mxu0 %v1842
      %1917 = vmatpush.msra.mxu0 %v1838
      %1918 = vmatpush.msra.mxu0 %v1834
      %1919 = vmatpush.msra.mxu0 %v1830
      %1920 = vmatmul.f32.gmra.mxu0 %v1854
      %v1921 = vpop.f32.mrf.mxu0
      %v1922 = vadd.f32 %v1851, %v1921
      %1923 = vdwg.mxu0
      %1924 = vmatpush.msra.mxu0 0.0
      %1925 = vmatpush.msra.mxu0 0.0
      %1926 = vmatpush.msra.mxu0 0.0
      %1927 = vmatpush.msra.mxu0 0.0
      %1928 = vmatpush.msra.mxu0 0.0
      %1929 = vmatpush.msra.mxu0 0.0
      %1930 = vmatpush.msra.mxu0 0.0
      %1931 = vmatpush.msra.mxu0 0.0
      %1932 = vmatpush.msra.mxu0 0.0
      %1933 = vmatpush.msra.mxu0 0.0
      %1934 = vmatpush.msra.mxu0 0.0
      %1935 = vmatpush.msra.mxu0 %v1862
      %1936 = vmatpush.msra.mxu0 %v1843
      %1937 = vmatpush.msra.mxu0 %v1839
      %1938 = vmatpush.msra.mxu0 %v1835
      %1939 = vmatpush.msra.mxu0 %v1831
      %1940 = vmatmul.f32.gmra.mxu0 %v1854
      %v1941 = vpop.f32.mrf.mxu0
      %v1942 = vadd.f32 %v1851, %v1941
      %1943 = vdwg.mxu0
      %1945 = vrot.lane.b32.xlu0 %v1882, 116
      %v1946 = vpop.permute.xlu0 %1945
      %1948 = vrot.lane.b32.xlu0 %v1882, 104
      %v1949 = vpop.permute.xlu0 %1948
      %1951 = vrot.lane.b32.xlu0 %v1882, 92
      %v1952 = vpop.permute.xlu0 %1951
      %1954 = vrot.lane.b32.xlu0 %v1882, 80
      %v1955 = vpop.permute.xlu0 %1954
      %1958 = vrot.lane.b32.xlu0 %v1902, 68
      %v1959 = vpop.permute.xlu0 %1958
      %1961 = vrot.lane.b32.xlu0 %v1902, 56
      %v1962 = vpop.permute.xlu0 %1961
      %1964 = vrot.lane.b32.xlu0 %v1902, 44
      %v1965 = vpop.permute.xlu0 %1964
      %1967 = vrot.lane.b32.xlu0 %v1902, 32
      %v1968 = vpop.permute.xlu0 %1967
      %1971 = vrot.lane.b32.xlu0 %v1902, 20
      %v1972 = vpop.permute.xlu0 %1971
      %1973 = vrot.lane.b32.xlu0 %v1922, 20
      %v1974 = vpop.permute.xlu0 %1973
      %v1975 = vsel %vm863, %v1972, %v1974
      %1977 = vrot.lane.b32.xlu0 %v1922, 8
      %v1978 = vpop.permute.xlu0 %1977
      %1980 = vrot.lane.b32.xlu0 %v1922, 124
      %v1981 = vpop.permute.xlu0 %1980
      %1983 = vrot.lane.b32.xlu0 %v1922, 112
      %v1984 = vpop.permute.xlu0 %1983
      %1986 = vrot.lane.b32.xlu0 %v1922, 100
      %v1987 = vpop.permute.xlu0 %1986
      %1990 = vrot.lane.b32.xlu0 %v1942, 88
      %v1991 = vpop.permute.xlu0 %1990
      %1993 = vrot.lane.b32.xlu0 %v1942, 76
      %v1994 = vpop.permute.xlu0 %1993
      %v1996 = vsel %vm541, %v1882, %v1946
      %v1997 = vsel %vm886, %v1996, %v1949
      %v1998 = vsel %vm888, %v1997, %v1952
      %v1999 = vsel %vm890, %v1998, %v1955
      %v2000 = vsel %vm892, %v1999, %v1959
      %v2001 = vsel %vm894, %v2000, %v1962
      %v2002 = vsel %vm896, %v2001, %v1965
      %v2003 = vsel %vm541, %v1968, %v1975
      %v2004 = vsel %vm886, %v2003, %v1978
      %v2005 = vsel %vm888, %v2004, %v1981
      %v2006 = vsel %vm890, %v2005, %v1984
      %v2007 = vsel %vm892, %v2006, %v1987
      %v2008 = vsel %vm894, %v2007, %v1991
      %v2009 = vsel %vm896, %v2008, %v1994
      %2010 = vst [vmem:[%s224 + $0x10] sm:$0xf] %v2002
      %2011 = vst [vmem:[%s224 + $0x18] sm:$0xf] %v2009
      %p2012 = scmp.lt.s32.totalorder %s16, 1
      %s2013 = scalar_select %p2012, %s16, 1
      %s2014 = smul.addr %s2013, 4
      %s2015 = smul.addr %s2014, 8
      %s2016 = scalar_lea.vmem %s5, %s2015
      // Predicated region
      $region41: #{tpu_custom_call.1} parent=39 // pred_check
        %p2017 = pneg %p144
      $region42: #{tpu_custom_call.1} parent=39 // pred_check_branch
        %2019 = sbr.rel (%p2017) target = $region44
      $region43: #{tpu_custom_call.1} parent=39 // pred_region
        _
      $region44: #{tpu_custom_call.1} parent=39 // pred_fallthru
        _
    $region40: #{tpu_custom_call.1} parent=5 // pred_fallthru
      _
    %p2020 = scmp.le.s32.totalorder 2, %s11
    // Predicated region
    $region45: #{tpu_custom_call.1} parent=5 // pred_check
      %p2021 = pneg %p2020
    $region46: #{tpu_custom_call.1} parent=5 // pred_check_branch
      %2023 = sbr.rel (%p2021) target = $region48
    $region47: #{tpu_custom_call.1} parent=5 // pred_region
      %s2024 = ssub.s32 %s11, 2
      // Predicated region
      $region49: #{tpu_custom_call.1} parent=47 // pred_check
        %p2025 = pneg %p150
      $region50: #{tpu_custom_call.1} parent=47 // pred_check_branch
        %2027 = sbr.rel (%p2025) target = $region52
      $region51: #{tpu_custom_call.1} parent=47 // pred_region
        %p2028 = scmp.lt.s32.totalorder %s17, 1
        %s2029 = scalar_select %p2028, %s17, 1
        %s2030 = smul.addr %s2029, 4
        %s2031 = smul.addr %s2030, 8
        %s2032 = scalar_lea.vmem %s5, %s2031
      $region52: #{tpu_custom_call.1} parent=47 // pred_fallthru
        _
    $region48: #{tpu_custom_call.1} parent=5 // pred_fallthru
      _
  $region6: #{tpu_custom_call.1} parent=0 // loop_footer
    %s15 = sadd.s32 1, %s11
  $region7: #{tpu_custom_call.1} parent=0 // loop_footer_branch
    %10 = sbr.rel target = $region3
  $region8: #{tpu_custom_call.1} parent=0 // loop_exit
    _

</llo_original>
